<compile_context>
chip_gen: v7x
topology: tpu7x:2x2x1
jax: 0.10.0
libtpu: 0.0.40
codegen_flags: <defaults>
</compile_context>

<pallas_src>
import functools
import math

import jax
import jax.numpy as jnp
from jax.experimental import pallas as pl
from jax.experimental.pallas import tpu as pltpu


def _round_up(x: int, m: int) -> int:
    return (x + m - 1) // m * m


def _pick_tile(n_pad: int, target: int) -> int:
    """Largest multiple-of-128 divisor of n_pad that is <= target (>=128)."""
    blocks = n_pad // 128
    for steps in range(1, blocks + 1):
        if blocks % steps == 0 and (blocks // steps) * 128 <= target:
            return (blocks // steps) * 128
    return 128


# ---------------------------------------------------------------------------
# Conv kernels: out[i] = relu( sum_k G[i,k] @ y[k] )   (+ optional fused hgc3)
#   G tile streamed from HBM (bf16), y fully resident in VMEM, f32 accumulator.
# ---------------------------------------------------------------------------
def _conv_kernel(g_ref, y_ref, o_ref, acc_ref):
    k = pl.program_id(1)

    @pl.when(k == 0)
    def _init():
        acc_ref[...] = jnp.zeros_like(acc_ref)

    acc_ref[...] += jnp.dot(g_ref[...], y_ref[k],
                            preferred_element_type=jnp.float32)

    @pl.when(k == pl.num_programs(1) - 1)
    def _finalize():
        o_ref[...] = jnp.maximum(acc_ref[...], 0.0).astype(o_ref.dtype)


def _conv_linear_kernel(g_ref, y_ref, w3_ref, b3_ref, o_ref, acc_ref):
    k = pl.program_id(1)

    @pl.when(k == 0)
    def _init():
        acc_ref[...] = jnp.zeros_like(acc_ref)

    acc_ref[...] += jnp.dot(g_ref[...], y_ref[k],
                            preferred_element_type=jnp.float32)

    @pl.when(k == pl.num_programs(1) - 1)
    def _finalize():
        h = jnp.maximum(acc_ref[...], 0.0).astype(jnp.bfloat16)
        o_ref[...] = (jnp.dot(h, w3_ref[...],
                              preferred_element_type=jnp.float32)
                      + b3_ref[...]).astype(o_ref.dtype)


def hgnn_conv(g_pad, y_pad, *, w3_pad=None, b3_pad=None,
              out_dtype=jnp.bfloat16, tile_m_target=512, tile_k_target=2048):
    """out = relu(G @ y), optionally followed by the fused final linear.

    g_pad: (n_pad, n_pad) bf16, pre-blended t*G1 + (1-t)*G2, zero padded.
    y_pad: (n_pad, fout_pad) bf16, per-unit linear output, zero padded.
    """
    n_pad = g_pad.shape[0]
    fout_pad = y_pad.shape[1]
    assert g_pad.shape == (n_pad, n_pad)
    assert y_pad.shape[0] == n_pad

    tile_m = _pick_tile(n_pad, tile_m_target)
    tile_k = _pick_tile(n_pad, tile_k_target)
    n_steps = n_pad // tile_k
    grid = (n_pad // tile_m, n_steps)

    # y is indexed per reduction step via ref[k]; the whole array stays
    # resident in VMEM (constant index_map) so G is the only streamed operand.
    y3 = y_pad.reshape(n_steps, tile_k, fout_pad)

    in_specs = [
        pl.BlockSpec((tile_m, tile_k), lambda i, k: (i, k)),                # G tile
        pl.BlockSpec((n_steps, tile_k, fout_pad), lambda i, k: (0, 0, 0)),  # resident y
    ]
    args = [g_pad, y3]
    if w3_pad is None:
        kernel = _conv_kernel
        out_cols = fout_pad
    else:
        kernel = _conv_linear_kernel
        out_cols = w3_pad.shape[1]
        in_specs += [
            pl.BlockSpec((fout_pad, out_cols), lambda i, k: (0, 0)),        # resident w3
            pl.BlockSpec((1, out_cols), lambda i, k: (0, 0)),               # resident bias
        ]
        args += [w3_pad, b3_pad]

    # VMEM budget (assume double-buffering everywhere) -> explicit scoped
    # limit: raises v5e's 16 MiB default when needed, stays inside v7x 64 MiB.
    est = (2 * tile_m * tile_k * 2          # G tiles, bf16
           + 2 * n_pad * fout_pad * 2       # resident y (conservatively x2)
           + 2 * tile_m * out_cols * 4      # output tiles
           + tile_m * fout_pad * 4)         # f32 accumulator scratch
    if w3_pad is not None:
        est += 2 * (fout_pad * out_cols * 2 + out_cols * 4)
    vmem_limit = int(min(max(est * 5 // 4, 32 * 1024 * 1024),
                         60 * 1024 * 1024))

    # TODO(synk): add pipeline_mode=pl.Buffered(3) on the G spec if profiling
    #             still shows exposed DMA after these structural changes.
    return pl.pallas_call(
        kernel,
        out_shape=jax.ShapeDtypeStruct((n_pad, out_cols), out_dtype),
        grid_spec=pltpu.PrefetchScalarGridSpec(
            num_scalar_prefetch=0,
            grid=grid,
            in_specs=in_specs,
            out_specs=pl.BlockSpec((tile_m, out_cols), lambda i, k: (i, 0)),
            scratch_shapes=[pltpu.VMEM((tile_m, fout_pad), jnp.float32)],
        ),
        compiler_params=pltpu.CompilerParams(
            dimension_semantics=("parallel", "arbitrary"),
            vmem_limit_bytes=vmem_limit),
    )(*args)


# ---------------------------------------------------------------------------
# Per-unit (block-diagonal) linear, computed once per layer in plain XLA.
# ---------------------------------------------------------------------------
def _unit_linear(h, w):
    """(N, U*Fin) x (U, Fin, Fout) -> (N, U*Fout)."""
    n = h.shape[0]
    u, fi, fo = w.shape
    y = jnp.einsum("nui,uio->nuo", h.reshape(n, u, fi).astype(jnp.float32), w)
    return y.reshape(n, u * fo)


# ---------------------------------------------------------------------------
# Full HGNN_time forward (eval mode).
# ---------------------------------------------------------------------------
def hgnn_time_forward(params, x_idx, g1, g2, t):
    """Assumed HGNN_t_conv_v5 semantics:
         y   = blockdiag_u(x_u @ W_u)              (per-unit linear)
         out = t * G1 @ y + (1 - t) * G2 @ y       (time-blended propagation)
    # TODO(synk): replace with the real HGNN_t_conv_v5 math (bias / op order /
    #             normalization) if its source becomes available.
    """
    n = x_idx.shape[0]
    u, _, fo1 = params["w1"].shape
    _, _, fo2 = params["w2"].shape
    n_class = params["b3"].shape[0]

    fout1_pad = _round_up(u * fo1, 128)
    fout2_pad = _round_up(u * fo2, 128)
    cls_pad = _round_up(n_class, 128)
    n_pad = _round_up(n, 128)

    # Embedding lookup + relu + flatten.
    # TODO(synk): data-dependent row gather kept in plain JAX (a Pallas version
    #             would need a manual-DMA / pl.Element gather kernel).
    emb = jnp.take(params["embedding"], x_idx, axis=0)            # (N, S, D)
    h = jnp.maximum(emb, 0.0).reshape(n, -1)                      # (N, U*Fin1)

    # Pre-blend the two hypergraph operators ONCE (f32 blend -> bf16, padded).
    g = (t * g1.astype(jnp.float32)
         + (1.0 - t) * g2.astype(jnp.float32)).astype(jnp.bfloat16)
    g_pad = jnp.pad(g, ((0, n_pad - n), (0, n_pad - n)))

    # Layer 1: hgc1 + relu (relu fused into the kernel finalize).
    y1 = _unit_linear(h, params["w1"])
    y1_pad = jnp.pad(y1.astype(jnp.bfloat16),
                     ((0, n_pad - n), (0, fout1_pad - u * fo1)))
    h1 = hgnn_conv(g_pad, y1_pad)                                 # (n_pad, fout1_pad) bf16
    # dropout (training=False) -> identity

    # Layer 2: hgc2 + relu fused with hgc3 linear + bias.
    y2 = _unit_linear(h1[:, :u * fo1], params["w2"])              # rows stay padded
    y2_pad = jnp.pad(y2.astype(jnp.bfloat16),
                     ((0, 0), (0, fout2_pad - u * fo2)))
    w3_pad = jnp.pad(params["w3"].astype(jnp.bfloat16),
                     ((0, fout2_pad - u * fo2), (0, cls_pad - n_class)))
    b3_pad = jnp.pad(params["b3"].astype(jnp.float32),
                     (0, cls_pad - n_class)).reshape(1, cls_pad)
    out = hgnn_conv(g_pad, y2_pad, w3_pad=w3_pad, b3_pad=b3_pad,
                    out_dtype=jnp.float32)                        # (n_pad, cls_pad)
    # dropout (training=False) -> identity

    return out[:n, :n_class]


def _reference_forward(params, x_idx, g1, g2, t):
    """Pure-JAX f32 reference with the same assumed semantics."""
    emb = jnp.maximum(jnp.take(params["embedding"], x_idx, axis=0), 0.0)
    h = emb.reshape(x_idx.shape[0], -1)
    for w in (params["w1"], params["w2"]):
        uu, fi, _ = w.shape
        y = jnp.concatenate(
            [h[:, i * fi:(i + 1) * fi] @ w[i] for i in range(uu)], axis=1)
        h = jnp.maximum(t * (g1 @ y) + (1.0 - t) * (g2 @ y), 0.0)
    return h @ params["w3"] + params["b3"]


if __name__ == "__main__":
    key = jax.random.PRNGKey(0)
    # Small, deterministic shapes (the real model uses N=15279 nodes).
    n_nodes = 240
    unit_num = 2
    unit_size = 2
    embedding_dim = 8
    embedding_num = 64
    k = (24, 16)
    n_class = 5
    t = 0.3
    seq = unit_num * unit_size                   # tokens per node

    ks = jax.random.split(key, 8)
    x_idx = jax.random.randint(ks[0], (n_nodes, seq), 0, embedding_num + 1,
                               dtype=jnp.int32)
    emb_table = jax.random.normal(ks[1], (embedding_num + 1, embedding_dim),
                                  jnp.float32)
    emb_table = emb_table.at[0].set(0.0)         # padding_idx = 0

    u1 = jax.random.uniform(ks[2], (n_nodes, n_nodes), dtype=jnp.float32)
    u2 = jax.random.uniform(ks[3], (n_nodes, n_nodes), dtype=jnp.float32)
    g1 = u1 / jnp.sum(u1, axis=1, keepdims=True)  # row-stochastic operators
    g2 = u2 / jnp.sum(u2, axis=1, keepdims=True)

    fin1 = unit_size * embedding_dim
    params = {
        "embedding": emb_table,
        "w1": jax.random.normal(ks[4], (unit_num, fin1, k[0]), jnp.float32)
              / math.sqrt(fin1),
        "w2": jax.random.normal(ks[5], (unit_num, k[0], k[1]), jnp.float32)
              / math.sqrt(k[0]),
        "w3": jax.random.normal(ks[6], (unit_num * k[1], n_class), jnp.float32)
              / math.sqrt(unit_num * k[1]),
        "b3": 0.1 * jax.random.normal(ks[7], (n_class,), jnp.float32),
    }

    fwd = jax.jit(functools.partial(hgnn_time_forward, t=t))
    out = jax.block_until_ready(fwd(params, x_idx, g1, g2))
    assert out.shape == (n_nodes, n_class)

    # Loose correctness check vs an f32 pure-JAX reference (kernel uses bf16
    # MXU inputs with f32 accumulation).
    ref = _reference_forward(params, x_idx, g1, g2, t)
    err = float(jnp.max(jnp.abs(out - ref)))
    scale = float(jnp.max(jnp.abs(ref))) + 1e-6
    assert err <= 0.05 * scale + 1e-2, f"mismatch: max|diff|={err}, scale={scale}"

    print("KERNEL_OK")
</pallas_src>

<mosaic_0001>
module attributes {stable_mosaic.version = 11 : i64} {
  func.func @_conv_kernel(%arg0: i32, %arg1: i32, %arg2: memref<256x256xbf16, #tpu.memory_space<vmem>>, %arg3: memref<1x256x128xbf16, #tpu.memory_space<vmem>>, %arg4: memref<256x128xbf16, #tpu.memory_space<vmem>>, %arg5: memref<256x128xf32, #tpu.memory_space<vmem>>) attributes {dimension_semantics = [#tpu.dimension_semantics<parallel>, #tpu.dimension_semantics<arbitrary>], iteration_bounds = array<i64: 1, 1>, scalar_prefetch = 0 : i64, scratch_operands = 1 : i64, tpu.core_type = #tpu.core_type<tc>, window_params = [{transform_indices = @transform_0, window_bounds = array<i64: 256, 256>}, {pipeline_mode = #tpu.pipeline_mode<synchronous>, transform_indices = @transform_1, window_bounds = array<i64: 1, 256, 128>}, {transform_indices = @transform_2, window_bounds = array<i64: 256, 128>}]} {
    %c0_i32 = arith.constant 0 : i32
    %0 = arith.cmpi eq, %arg1, %c0_i32 : i32
    %1 = arith.extui %0 : i1 to i32
    %c0_i32_0 = arith.constant 0 : i32
    %2 = arith.cmpi ne, %1, %c0_i32_0 : i32
    scf.if %2 {
      %cst_10 = arith.constant 0.000000e+00 : f32
      %14 = vector.broadcast %cst_10 : f32 to vector<256x128xf32>
      %c0_11 = arith.constant 0 : index
      %c0_12 = arith.constant 0 : index
      %15 = vector.load %arg5[%c0_11, %c0_12] : memref<256x128xf32, #tpu.memory_space<vmem>>, vector<256x128xf32>
      tpu.vector_store %arg5[%c0_11, %c0_12], %14 {strides = array<i32>} : memref<256x128xf32, #tpu.memory_space<vmem>>, vector<256x128xf32>,
    } else {
    }
    %c0 = arith.constant 0 : index
    %c0_1 = arith.constant 0 : index
    %3 = vector.load %arg5[%c0, %c0_1] : memref<256x128xf32, #tpu.memory_space<vmem>>, vector<256x128xf32>
    %c0_2 = arith.constant 0 : index
    %c0_3 = arith.constant 0 : index
    %4 = vector.load %arg2[%c0_2, %c0_3] : memref<256x256xbf16, #tpu.memory_space<vmem>>, vector<256x256xbf16>
    %5 = arith.index_cast %arg1 : i32 to index
    %c0_4 = arith.constant 0 : index
    %c0_5 = arith.constant 0 : index
    %6 = vector.load %arg3[%5, %c0_4, %c0_5] : memref<1x256x128xbf16, #tpu.memory_space<vmem>>, vector<1x256x128xbf16>
    %7 = vector.shape_cast %6 : vector<1x256x128xbf16> to vector<256x128xbf16>
    %cst = arith.constant dense<0.000000e+00> : vector<256x128xf32>
    %8 = tpu.matmul %4, %7, %cst {dimension_numbers = #tpu.dot_dimension_numbers<[1], [0], [0], [1], [0, 0, 1, 1], [], []>} : vector<256x256xbf16>, vector<256x128xbf16>, vector<256x128xf32> -> vector<256x128xf32>
    %9 = arith.addf %3, %8 : vector<256x128xf32>
    %c0_6 = arith.constant 0 : index
    %c0_7 = arith.constant 0 : index
    %10 = vector.load %arg5[%c0_6, %c0_7] : memref<256x128xf32, #tpu.memory_space<vmem>>, vector<256x128xf32>
    tpu.vector_store %arg5[%c0_6, %c0_7], %9 {strides = array<i32>} : memref<256x128xf32, #tpu.memory_space<vmem>>, vector<256x128xf32>,
    %c0_i32_8 = arith.constant 0 : i32
    %11 = arith.cmpi eq, %arg1, %c0_i32_8 : i32
    %12 = arith.extui %11 : i1 to i32
    %c0_i32_9 = arith.constant 0 : i32
    %13 = arith.cmpi ne, %12, %c0_i32_9 : i32
    scf.if %13 {
      %c0_10 = arith.constant 0 : index
      %c0_11 = arith.constant 0 : index
      %14 = vector.load %arg5[%c0_10, %c0_11] : memref<256x128xf32, #tpu.memory_space<vmem>>, vector<256x128xf32>
      %cst_12 = arith.constant 0.000000e+00 : f32
      %15 = vector.broadcast %cst_12 : f32 to vector<256x128xf32>
      %16 = arith.maximumf %14, %15 : vector<256x128xf32>
      %17 = arith.truncf %16 : vector<256x128xf32> to vector<256x128xbf16>
      %c0_13 = arith.constant 0 : index
      %c0_14 = arith.constant 0 : index
      %18 = vector.load %arg4[%c0_13, %c0_14] : memref<256x128xbf16, #tpu.memory_space<vmem>>, vector<256x128xbf16>
      tpu.vector_store %arg4[%c0_13, %c0_14], %17 {strides = array<i32>} : memref<256x128xbf16, #tpu.memory_space<vmem>>, vector<256x128xbf16>,
    } else {
    }
    return
  }
  func.func @transform_0(%arg0: i32, %arg1: i32) -> (i32, i32) {
    %c0_i32 = arith.constant 0 : i32
    return %arg0, %arg1 : i32, i32
  }
  func.func @transform_1(%arg0: i32, %arg1: i32) -> (i32, i32, i32) {
    %c0_i32 = arith.constant 0 : i32
    %c0_i32_0 = arith.constant 0 : i32
    %c0_i32_1 = arith.constant 0 : i32
    %c0_i32_2 = arith.constant 0 : i32
    return %c0_i32, %c0_i32_0, %c0_i32_1 : i32, i32, i32
  }
  func.func @transform_2(%arg0: i32, %arg1: i32) -> (i32, i32) {
    %c0_i32 = arith.constant 0 : i32
    %c0_i32_0 = arith.constant 0 : i32
    return %arg0, %c0_i32 : i32, i32
  }
}

module attributes {stable_mosaic.version = 11 : i64} {
  func.func @_conv_linear_kernel(%arg0: i32, %arg1: i32, %arg2: memref<256x256xbf16, #tpu.memory_space<vmem>>, %arg3: memref<1x256x128xbf16, #tpu.memory_space<vmem>>, %arg4: memref<128x128xbf16, #tpu.memory_space<vmem>>, %arg5: memref<1x128xf32, #tpu.memory_space<vmem>>, %arg6: memref<256x128xf32, #tpu.memory_space<vmem>>, %arg7: memref<256x128xf32, #tpu.memory_space<vmem>>) attributes {dimension_semantics = [#tpu.dimension_semantics<parallel>, #tpu.dimension_semantics<arbitrary>], iteration_bounds = array<i64: 1, 1>, scalar_prefetch = 0 : i64, scratch_operands = 1 : i64, tpu.core_type = #tpu.core_type<tc>, window_params = [{transform_indices = @transform_0, window_bounds = array<i64: 256, 256>}, {pipeline_mode = #tpu.pipeline_mode<synchronous>, transform_indices = @transform_1, window_bounds = array<i64: 1, 256, 128>}, {pipeline_mode = #tpu.pipeline_mode<synchronous>, transform_indices = @transform_2, window_bounds = array<i64: 128, 128>}, {pipeline_mode = #tpu.pipeline_mode<synchronous>, transform_indices = @transform_3, window_bounds = array<i64: 1, 128>}, {transform_indices = @transform_4, window_bounds = array<i64: 256, 128>}]} {
    %c0_i32 = arith.constant 0 : i32
    %0 = arith.cmpi eq, %arg1, %c0_i32 : i32
    %1 = arith.extui %0 : i1 to i32
    %c0_i32_0 = arith.constant 0 : i32
    %2 = arith.cmpi ne, %1, %c0_i32_0 : i32
    scf.if %2 {
      %cst_10 = arith.constant 0.000000e+00 : f32
      %14 = vector.broadcast %cst_10 : f32 to vector<256x128xf32>
      %c0_11 = arith.constant 0 : index
      %c0_12 = arith.constant 0 : index
      %15 = vector.load %arg7[%c0_11, %c0_12] : memref<256x128xf32, #tpu.memory_space<vmem>>, vector<256x128xf32>
      tpu.vector_store %arg7[%c0_11, %c0_12], %14 {strides = array<i32>} : memref<256x128xf32, #tpu.memory_space<vmem>>, vector<256x128xf32>,
    } else {
    }
    %c0 = arith.constant 0 : index
    %c0_1 = arith.constant 0 : index
    %3 = vector.load %arg7[%c0, %c0_1] : memref<256x128xf32, #tpu.memory_space<vmem>>, vector<256x128xf32>
    %c0_2 = arith.constant 0 : index
    %c0_3 = arith.constant 0 : index
    %4 = vector.load %arg2[%c0_2, %c0_3] : memref<256x256xbf16, #tpu.memory_space<vmem>>, vector<256x256xbf16>
    %5 = arith.index_cast %arg1 : i32 to index
    %c0_4 = arith.constant 0 : index
    %c0_5 = arith.constant 0 : index
    %6 = vector.load %arg3[%5, %c0_4, %c0_5] : memref<1x256x128xbf16, #tpu.memory_space<vmem>>, vector<1x256x128xbf16>
    %7 = vector.shape_cast %6 : vector<1x256x128xbf16> to vector<256x128xbf16>
    %cst = arith.constant dense<0.000000e+00> : vector<256x128xf32>
    %8 = tpu.matmul %4, %7, %cst {dimension_numbers = #tpu.dot_dimension_numbers<[1], [0], [0], [1], [0, 0, 1, 1], [], []>} : vector<256x256xbf16>, vector<256x128xbf16>, vector<256x128xf32> -> vector<256x128xf32>
    %9 = arith.addf %3, %8 : vector<256x128xf32>
    %c0_6 = arith.constant 0 : index
    %c0_7 = arith.constant 0 : index
    %10 = vector.load %arg7[%c0_6, %c0_7] : memref<256x128xf32, #tpu.memory_space<vmem>>, vector<256x128xf32>
    tpu.vector_store %arg7[%c0_6, %c0_7], %9 {strides = array<i32>} : memref<256x128xf32, #tpu.memory_space<vmem>>, vector<256x128xf32>,
    %c0_i32_8 = arith.constant 0 : i32
    %11 = arith.cmpi eq, %arg1, %c0_i32_8 : i32
    %12 = arith.extui %11 : i1 to i32
    %c0_i32_9 = arith.constant 0 : i32
    %13 = arith.cmpi ne, %12, %c0_i32_9 : i32
    scf.if %13 {
      %c0_10 = arith.constant 0 : index
      %c0_11 = arith.constant 0 : index
      %14 = vector.load %arg7[%c0_10, %c0_11] : memref<256x128xf32, #tpu.memory_space<vmem>>, vector<256x128xf32>
      %cst_12 = arith.constant 0.000000e+00 : f32
      %15 = vector.broadcast %cst_12 : f32 to vector<256x128xf32>
      %16 = arith.maximumf %14, %15 : vector<256x128xf32>
      %17 = arith.truncf %16 : vector<256x128xf32> to vector<256x128xbf16>
      %c0_13 = arith.constant 0 : index
      %c0_14 = arith.constant 0 : index
      %18 = vector.load %arg4[%c0_13, %c0_14] : memref<128x128xbf16, #tpu.memory_space<vmem>>, vector<128x128xbf16>
      %cst_15 = arith.constant dense<0.000000e+00> : vector<256x128xf32>
      %19 = tpu.matmul %17, %18, %cst_15 {dimension_numbers = #tpu.dot_dimension_numbers<[1], [0], [0], [1], [0, 0, 1, 1], [], []>} : vector<256x128xbf16>, vector<128x128xbf16>, vector<256x128xf32> -> vector<256x128xf32>
      %c0_16 = arith.constant 0 : index
      %c0_17 = arith.constant 0 : index
      %20 = vector.load %arg5[%c0_16, %c0_17] : memref<1x128xf32, #tpu.memory_space<vmem>>, vector<1x128xf32>
      %21 = vector.broadcast %20 : vector<1x128xf32> to vector<256x128xf32>
      %22 = arith.addf %19, %21 : vector<256x128xf32>
      %c0_18 = arith.constant 0 : index
      %c0_19 = arith.constant 0 : index
      %23 = vector.load %arg6[%c0_18, %c0_19] : memref<256x128xf32, #tpu.memory_space<vmem>>, vector<256x128xf32>
      tpu.vector_store %arg6[%c0_18, %c0_19], %22 {strides = array<i32>} : memref<256x128xf32, #tpu.memory_space<vmem>>, vector<256x128xf32>,
    } else {
    }
    return
  }
  func.func @transform_0(%arg0: i32, %arg1: i32) -> (i32, i32) {
    %c0_i32 = arith.constant 0 : i32
    return %arg0, %arg1 : i32, i32
  }
  func.func @transform_1(%arg0: i32, %arg1: i32) -> (i32, i32, i32) {
    %c0_i32 = arith.constant 0 : i32
    %c0_i32_0 = arith.constant 0 : i32
    %c0_i32_1 = arith.constant 0 : i32
    %c0_i32_2 = arith.constant 0 : i32
    return %c0_i32, %c0_i32_0, %c0_i32_1 : i32, i32, i32
  }
  func.func @transform_2(%arg0: i32, %arg1: i32) -> (i32, i32) {
    %c0_i32 = arith.constant 0 : i32
    %c0_i32_0 = arith.constant 0 : i32
    %c0_i32_1 = arith.constant 0 : i32
    return %c0_i32, %c0_i32_0 : i32, i32
  }
  func.func @transform_3(%arg0: i32, %arg1: i32) -> (i32, i32) {
    %c0_i32 = arith.constant 0 : i32
    %c0_i32_0 = arith.constant 0 : i32
    %c0_i32_1 = arith.constant 0 : i32
    return %c0_i32, %c0_i32_0 : i32, i32
  }
  func.func @transform_4(%arg0: i32, %arg1: i32) -> (i32, i32) {
    %c0_i32 = arith.constant 0 : i32
    %c0_i32_0 = arith.constant 0 : i32
    return %arg0, %c0_i32 : i32, i32
  }
}

</mosaic_0001>

<llo_original>
// kernel: hgnn_time_forward.2
$region0: #{hgnn_time_forward.2}
  #allocation0 [shape = 'u32[]', space=smem, size = 0x4, offset = 0x4, fixed_abs, tag = 'smem constant byte address 0x4 - core index']
  #allocation1 [shape = 'u32[144,128]{1,0:T(1,128)}', space=vmem, size = 0x12000, scoped, tag = 'internal scratch']
  #allocation2 [shape = 'f32[256,128]{1,0:T(8,128)}', space=vmem, size = 0x20000, scoped, tag = 'scratch operand']
  %s0 = inlined_call_operand.vmem [shape: bf16[256,256], index: 0, kind: input, shape index: {}]
  %s1 = inlined_call_operand.vmem [shape: bf16[1,256,128], index: 1, kind: input, shape index: {}]
  %s2 = inlined_call_operand.vmem [shape: bf16[256,128], index: 2, kind: output, shape index: {}]
  %s3 = sld [smem:[#allocation0]]
  $region26: #{hgnn_time_forward.2} parent=0
    _
  %s5 = ssub.s32 1, %s3
  %s6 = scalar_select 0, %s5, %s3
  // Predicated region
  $region2: #{hgnn_time_forward.2} parent=0 // pred_check
    _
  $region3: #{hgnn_time_forward.2} parent=0 // pred_check_branch
    %8 = sbr.rel (0) target = $region5
  $region4: #{hgnn_time_forward.2} parent=0 // pred_region
    _
  $region5: #{hgnn_time_forward.2} parent=0 // pred_fallthru
    _
  // Predicated region
  $region6: #{hgnn_time_forward.2} parent=0 // pred_check
    _
  $region7: #{hgnn_time_forward.2} parent=0 // pred_check_branch
    %10 = sbr.rel (0) target = $region9
  $region8: #{hgnn_time_forward.2} parent=0 // pred_region
    _
  $region9: #{hgnn_time_forward.2} parent=0 // pred_fallthru
    _
  %p12 = scmp.eq.s32.totalorder 0, 0
  // Predicated region
  $region10: #{hgnn_time_forward.2} parent=0 // pred_check
    %p13 = pneg %p12
  $region11: #{hgnn_time_forward.2} parent=0 // pred_check_branch
    %15 = sbr.rel (%p13) target = $region13
  $region12: #{hgnn_time_forward.2} parent=0 // pred_region
    %16 = vst [vmem:[#allocation2] sm:$0xff] 0.0
    %17 = vst [vmem:[#allocation2 + $0x8] sm:$0xff] 0.0
    %18 = vst [vmem:[#allocation2 + $0x10] sm:$0xff] 0.0
    %19 = vst [vmem:[#allocation2 + $0x18] sm:$0xff] 0.0
    %20 = vst [vmem:[#allocation2 + $0x20] sm:$0xff] 0.0
    %21 = vst [vmem:[#allocation2 + $0x28] sm:$0xff] 0.0
    %22 = vst [vmem:[#allocation2 + $0x30] sm:$0xff] 0.0
    %23 = vst [vmem:[#allocation2 + $0x38] sm:$0xff] 0.0
    %24 = vst [vmem:[#allocation2 + $0x40] sm:$0xff] 0.0
    %25 = vst [vmem:[#allocation2 + $0x48] sm:$0xff] 0.0
    %26 = vst [vmem:[#allocation2 + $0x50] sm:$0xff] 0.0
    %27 = vst [vmem:[#allocation2 + $0x58] sm:$0xff] 0.0
    %28 = vst [vmem:[#allocation2 + $0x60] sm:$0xff] 0.0
    %29 = vst [vmem:[#allocation2 + $0x68] sm:$0xff] 0.0
    %30 = vst [vmem:[#allocation2 + $0x70] sm:$0xff] 0.0
    %31 = vst [vmem:[#allocation2 + $0x78] sm:$0xff] 0.0
    %32 = vst [vmem:[#allocation2 + $0x80] sm:$0xff] 0.0
    %33 = vst [vmem:[#allocation2 + $0x88] sm:$0xff] 0.0
    %34 = vst [vmem:[#allocation2 + $0x90] sm:$0xff] 0.0
    %35 = vst [vmem:[#allocation2 + $0x98] sm:$0xff] 0.0
    %36 = vst [vmem:[#allocation2 + $0xa0] sm:$0xff] 0.0
    %37 = vst [vmem:[#allocation2 + $0xa8] sm:$0xff] 0.0
    %38 = vst [vmem:[#allocation2 + $0xb0] sm:$0xff] 0.0
    %39 = vst [vmem:[#allocation2 + $0xb8] sm:$0xff] 0.0
    %40 = vst [vmem:[#allocation2 + $0xc0] sm:$0xff] 0.0
    %41 = vst [vmem:[#allocation2 + $0xc8] sm:$0xff] 0.0
    %42 = vst [vmem:[#allocation2 + $0xd0] sm:$0xff] 0.0
    %43 = vst [vmem:[#allocation2 + $0xd8] sm:$0xff] 0.0
    %44 = vst [vmem:[#allocation2 + $0xe0] sm:$0xff] 0.0
    %45 = vst [vmem:[#allocation2 + $0xe8] sm:$0xff] 0.0
    %46 = vst [vmem:[#allocation2 + $0xf0] sm:$0xff] 0.0
    %47 = vst [vmem:[#allocation2 + $0xf8] sm:$0xff] 0.0
  $region13: #{hgnn_time_forward.2} parent=0 // pred_fallthru
    _
  %v48 = vld [vmem:[#allocation2] sm:$0xff]
  %v49 = vld [vmem:[#allocation2 + $0x8] sm:$0xff]
  %v50 = vld [vmem:[#allocation2 + $0x10] sm:$0xff]
  %v51 = vld [vmem:[#allocation2 + $0x18] sm:$0xff]
  %v52 = vld [vmem:[#allocation2 + $0x20] sm:$0xff]
  %v53 = vld [vmem:[#allocation2 + $0x28] sm:$0xff]
  %v54 = vld [vmem:[#allocation2 + $0x30] sm:$0xff]
  %v55 = vld [vmem:[#allocation2 + $0x38] sm:$0xff]
  %v56 = vld [vmem:[#allocation2 + $0x40] sm:$0xff]
  %v57 = vld [vmem:[#allocation2 + $0x48] sm:$0xff]
  %v58 = vld [vmem:[#allocation2 + $0x50] sm:$0xff]
  %v59 = vld [vmem:[#allocation2 + $0x58] sm:$0xff]
  %v60 = vld [vmem:[#allocation2 + $0x60] sm:$0xff]
  %v61 = vld [vmem:[#allocation2 + $0x68] sm:$0xff]
  %v62 = vld [vmem:[#allocation2 + $0x70] sm:$0xff]
  %v63 = vld [vmem:[#allocation2 + $0x78] sm:$0xff]
  %v64 = vld [vmem:[#allocation2 + $0x80] sm:$0xff]
  %v65 = vld [vmem:[#allocation2 + $0x88] sm:$0xff]
  %v66 = vld [vmem:[#allocation2 + $0x90] sm:$0xff]
  %v67 = vld [vmem:[#allocation2 + $0x98] sm:$0xff]
  %v68 = vld [vmem:[#allocation2 + $0xa0] sm:$0xff]
  %v69 = vld [vmem:[#allocation2 + $0xa8] sm:$0xff]
  %v70 = vld [vmem:[#allocation2 + $0xb0] sm:$0xff]
  %v71 = vld [vmem:[#allocation2 + $0xb8] sm:$0xff]
  %v72 = vld [vmem:[#allocation2 + $0xc0] sm:$0xff]
  %v73 = vld [vmem:[#allocation2 + $0xc8] sm:$0xff]
  %v74 = vld [vmem:[#allocation2 + $0xd0] sm:$0xff]
  %v75 = vld [vmem:[#allocation2 + $0xd8] sm:$0xff]
  %v76 = vld [vmem:[#allocation2 + $0xe0] sm:$0xff]
  %v77 = vld [vmem:[#allocation2 + $0xe8] sm:$0xff]
  %v78 = vld [vmem:[#allocation2 + $0xf0] sm:$0xff]
  %v79 = vld [vmem:[#allocation2 + $0xf8] sm:$0xff]
  %v80 = vld [vmem:[%s0] sm:$0xff]
  %v81 = vld [vmem:[%s0 + $0x8] sm:$0xff]
  %v82 = vld [vmem:[%s0 + $0x10] sm:$0xff]
  %v83 = vld [vmem:[%s0 + $0x18] sm:$0xff]
  %v84 = vld [vmem:[%s0 + $0x20] sm:$0xff]
  %v85 = vld [vmem:[%s0 + $0x28] sm:$0xff]
  %v86 = vld [vmem:[%s0 + $0x30] sm:$0xff]
  %v87 = vld [vmem:[%s0 + $0x38] sm:$0xff]
  %v88 = vld [vmem:[%s0 + $0x40] sm:$0xff]
  %v89 = vld [vmem:[%s0 + $0x48] sm:$0xff]
  %v90 = vld [vmem:[%s0 + $0x50] sm:$0xff]
  %v91 = vld [vmem:[%s0 + $0x58] sm:$0xff]
  %v92 = vld [vmem:[%s0 + $0x60] sm:$0xff]
  %v93 = vld [vmem:[%s0 + $0x68] sm:$0xff]
  %v94 = vld [vmem:[%s0 + $0x70] sm:$0xff]
  %v95 = vld [vmem:[%s0 + $0x78] sm:$0xff]
  %v96 = vld [vmem:[%s0 + $0x80] sm:$0xff]
  %v97 = vld [vmem:[%s0 + $0x88] sm:$0xff]
  %v98 = vld [vmem:[%s0 + $0x90] sm:$0xff]
  %v99 = vld [vmem:[%s0 + $0x98] sm:$0xff]
  %v100 = vld [vmem:[%s0 + $0xa0] sm:$0xff]
  %v101 = vld [vmem:[%s0 + $0xa8] sm:$0xff]
  %v102 = vld [vmem:[%s0 + $0xb0] sm:$0xff]
  %v103 = vld [vmem:[%s0 + $0xb8] sm:$0xff]
  %v104 = vld [vmem:[%s0 + $0xc0] sm:$0xff]
  %v105 = vld [vmem:[%s0 + $0xc8] sm:$0xff]
  %v106 = vld [vmem:[%s0 + $0xd0] sm:$0xff]
  %v107 = vld [vmem:[%s0 + $0xd8] sm:$0xff]
  %v108 = vld [vmem:[%s0 + $0xe0] sm:$0xff]
  %v109 = vld [vmem:[%s0 + $0xe8] sm:$0xff]
  %v110 = vld [vmem:[%s0 + $0xf0] sm:$0xff]
  %v111 = vld [vmem:[%s0 + $0xf8] sm:$0xff]
  %s112 = smul.u32 0, 32
  %s113 = smul.addr %s112, 4
  %s114 = scalar_lea.vmem %s1, %s113
  %v115 = vld [vmem:[%s114] sm:$0xf]
  %v116 = vld [vmem:[%s114 + $0x4] sm:$0xf]
  %v117 = vld [vmem:[%s114 + $0x8] sm:$0xf]
  %v118 = vld [vmem:[%s114 + $0xc] sm:$0xf]
  %v119 = vld [vmem:[%s114 + $0x10] sm:$0xf]
  %v120 = vld [vmem:[%s114 + $0x14] sm:$0xf]
  %v121 = vld [vmem:[%s114 + $0x18] sm:$0xf]
  %v122 = vld [vmem:[%s114 + $0x1c] sm:$0xf]
  %v123 = vld [vmem:[%s114 + $0x20] sm:$0xf]
  %v124 = vld [vmem:[%s114 + $0x24] sm:$0xf]
  %v125 = vld [vmem:[%s114 + $0x28] sm:$0xf]
  %v126 = vld [vmem:[%s114 + $0x2c] sm:$0xf]
  %v127 = vld [vmem:[%s114 + $0x30] sm:$0xf]
  %v128 = vld [vmem:[%s114 + $0x34] sm:$0xf]
  %v129 = vld [vmem:[%s114 + $0x38] sm:$0xf]
  %v130 = vld [vmem:[%s114 + $0x3c] sm:$0xf]
  %v131 = vld [vmem:[%s114 + $0x40] sm:$0xf]
  %v132 = vld [vmem:[%s114 + $0x44] sm:$0xf]
  %v133 = vld [vmem:[%s114 + $0x48] sm:$0xf]
  %v134 = vld [vmem:[%s114 + $0x4c] sm:$0xf]
  %v135 = vld [vmem:[%s114 + $0x50] sm:$0xf]
  %v136 = vld [vmem:[%s114 + $0x54] sm:$0xf]
  %v137 = vld [vmem:[%s114 + $0x58] sm:$0xf]
  %v138 = vld [vmem:[%s114 + $0x5c] sm:$0xf]
  %v139 = vld [vmem:[%s114 + $0x60] sm:$0xf]
  %v140 = vld [vmem:[%s114 + $0x64] sm:$0xf]
  %v141 = vld [vmem:[%s114 + $0x68] sm:$0xf]
  %v142 = vld [vmem:[%s114 + $0x6c] sm:$0xf]
  %v143 = vld [vmem:[%s114 + $0x70] sm:$0xf]
  %v144 = vld [vmem:[%s114 + $0x74] sm:$0xf]
  %v145 = vld [vmem:[%s114 + $0x78] sm:$0xf]
  %v146 = vld [vmem:[%s114 + $0x7c] sm:$0xf]
  %v179 = vunpack.c.l.b16 %v80
  %v180 = vunpack.c.h.b16 %v80
  %v181 = vunpack.c.l.b16 %v81
  %v182 = vunpack.c.h.b16 %v81
  %v183 = vunpack.c.l.b16 %v82
  %v184 = vunpack.c.h.b16 %v82
  %v185 = vunpack.c.l.b16 %v83
  %v186 = vunpack.c.h.b16 %v83
  %v187 = vunpack.c.l.b16 %v84
  %v188 = vunpack.c.h.b16 %v84
  %v189 = vunpack.c.l.b16 %v85
  %v190 = vunpack.c.h.b16 %v85
  %v191 = vunpack.c.l.b16 %v86
  %v192 = vunpack.c.h.b16 %v86
  %v193 = vunpack.c.l.b16 %v87
  %v194 = vunpack.c.h.b16 %v87
  %v195 = vunpack.c.l.b16 %v88
  %v196 = vunpack.c.h.b16 %v88
  %v197 = vunpack.c.l.b16 %v89
  %v198 = vunpack.c.h.b16 %v89
  %v199 = vunpack.c.l.b16 %v90
  %v200 = vunpack.c.h.b16 %v90
  %v201 = vunpack.c.l.b16 %v91
  %v202 = vunpack.c.h.b16 %v91
  %v203 = vunpack.c.l.b16 %v92
  %v204 = vunpack.c.h.b16 %v92
  %v205 = vunpack.c.l.b16 %v93
  %v206 = vunpack.c.h.b16 %v93
  %v207 = vunpack.c.l.b16 %v94
  %v208 = vunpack.c.h.b16 %v94
  %v209 = vunpack.c.l.b16 %v95
  %v210 = vunpack.c.h.b16 %v95
  %v211 = vunpack.c.l.b16 %v96
  %v212 = vunpack.c.h.b16 %v96
  %v213 = vunpack.c.l.b16 %v97
  %v214 = vunpack.c.h.b16 %v97
  %v215 = vunpack.c.l.b16 %v98
  %v216 = vunpack.c.h.b16 %v98
  %v217 = vunpack.c.l.b16 %v99
  %v218 = vunpack.c.h.b16 %v99
  %v219 = vunpack.c.l.b16 %v100
  %v220 = vunpack.c.h.b16 %v100
  %v221 = vunpack.c.l.b16 %v101
  %v222 = vunpack.c.h.b16 %v101
  %v223 = vunpack.c.l.b16 %v102
  %v224 = vunpack.c.h.b16 %v102
  %v225 = vunpack.c.l.b16 %v103
  %v226 = vunpack.c.h.b16 %v103
  %v227 = vunpack.c.l.b16 %v104
  %v228 = vunpack.c.h.b16 %v104
  %v229 = vunpack.c.l.b16 %v105
  %v230 = vunpack.c.h.b16 %v105
  %v231 = vunpack.c.l.b16 %v106
  %v232 = vunpack.c.h.b16 %v106
  %v233 = vunpack.c.l.b16 %v107
  %v234 = vunpack.c.h.b16 %v107
  %v235 = vunpack.c.l.b16 %v108
  %v236 = vunpack.c.h.b16 %v108
  %v237 = vunpack.c.l.b16 %v109
  %v238 = vunpack.c.h.b16 %v109
  %v239 = vunpack.c.l.b16 %v110
  %v240 = vunpack.c.h.b16 %v110
  %v241 = vunpack.c.l.b16 %v111
  %v242 = vunpack.c.h.b16 %v111
  %v243 = vpack.c.b16 %v181, %v179
  %v244 = vpack.c.b16 %v182, %v180
  %v245 = vpack.c.b16 %v185, %v183
  %v246 = vpack.c.b16 %v186, %v184
  %v247 = vpack.c.b16 %v189, %v187
  %v248 = vpack.c.b16 %v190, %v188
  %v249 = vpack.c.b16 %v193, %v191
  %v250 = vpack.c.b16 %v194, %v192
  %v251 = vpack.c.b16 %v197, %v195
  %v252 = vpack.c.b16 %v198, %v196
  %v253 = vpack.c.b16 %v201, %v199
  %v254 = vpack.c.b16 %v202, %v200
  %v255 = vpack.c.b16 %v205, %v203
  %v256 = vpack.c.b16 %v206, %v204
  %v257 = vpack.c.b16 %v209, %v207
  %v258 = vpack.c.b16 %v210, %v208
  %v259 = vpack.c.b16 %v213, %v211
  %v260 = vpack.c.b16 %v214, %v212
  %v261 = vpack.c.b16 %v217, %v215
  %v262 = vpack.c.b16 %v218, %v216
  %v263 = vpack.c.b16 %v221, %v219
  %v264 = vpack.c.b16 %v222, %v220
  %v265 = vpack.c.b16 %v225, %v223
  %v266 = vpack.c.b16 %v226, %v224
  %v267 = vpack.c.b16 %v229, %v227
  %v268 = vpack.c.b16 %v230, %v228
  %v269 = vpack.c.b16 %v233, %v231
  %v270 = vpack.c.b16 %v234, %v232
  %v271 = vpack.c.b16 %v237, %v235
  %v272 = vpack.c.b16 %v238, %v236
  %v273 = vpack.c.b16 %v241, %v239
  %v274 = vpack.c.b16 %v242, %v240
  %v339 = vunpack.c.l.b16 %v115
  %v340 = vunpack.c.l.b16 %v116
  %v341 = vunpack.c.l.b16 %v117
  %v342 = vunpack.c.l.b16 %v118
  %v343 = vunpack.c.l.b16 %v119
  %v344 = vunpack.c.l.b16 %v120
  %v345 = vunpack.c.l.b16 %v121
  %v346 = vunpack.c.l.b16 %v122
  %v347 = vunpack.c.l.b16 %v123
  %v348 = vunpack.c.l.b16 %v124
  %v349 = vunpack.c.l.b16 %v125
  %v350 = vunpack.c.l.b16 %v126
  %v351 = vunpack.c.l.b16 %v127
  %v352 = vunpack.c.l.b16 %v128
  %v353 = vunpack.c.l.b16 %v129
  %v354 = vunpack.c.l.b16 %v130
  %v355 = vunpack.c.l.b16 %v131
  %v356 = vunpack.c.l.b16 %v132
  %v357 = vunpack.c.l.b16 %v133
  %v358 = vunpack.c.l.b16 %v134
  %v359 = vunpack.c.l.b16 %v135
  %v360 = vunpack.c.l.b16 %v136
  %v361 = vunpack.c.l.b16 %v137
  %v362 = vunpack.c.l.b16 %v138
  %v363 = vunpack.c.l.b16 %v139
  %v364 = vunpack.c.l.b16 %v140
  %v365 = vunpack.c.l.b16 %v141
  %v366 = vunpack.c.l.b16 %v142
  %v367 = vunpack.c.l.b16 %v143
  %v368 = vunpack.c.l.b16 %v144
  %v369 = vunpack.c.l.b16 %v145
  %v370 = vunpack.c.l.b16 %v146
  %v371 = vpack.c.b16 %v340, %v339
  %v372 = vpack.c.b16 %v342, %v341
  %v373 = vpack.c.b16 %v344, %v343
  %v374 = vpack.c.b16 %v346, %v345
  %v375 = vpack.c.b16 %v348, %v347
  %v376 = vpack.c.b16 %v350, %v349
  %v377 = vpack.c.b16 %v352, %v351
  %v378 = vpack.c.b16 %v354, %v353
  %v379 = vpack.c.b16 %v356, %v355
  %v380 = vpack.c.b16 %v358, %v357
  %v381 = vpack.c.b16 %v360, %v359
  %v382 = vpack.c.b16 %v362, %v361
  %v383 = vpack.c.b16 %v364, %v363
  %v384 = vpack.c.b16 %v366, %v365
  %v385 = vpack.c.b16 %v368, %v367
  %v386 = vpack.c.b16 %v370, %v369
  %403 = vmatprep.subr.bf16.mxu0 0
  %404 = vmatpush1.bf16.msra.mxu0 %v371
  %405 = vmatprep.subr.bf16.mxu0 0
  %406 = vmatpush1.bf16.msra.mxu0 %v372
  %407 = vmatprep.subr.bf16.mxu0 0
  %408 = vmatpush1.bf16.msra.mxu0 %v373
  %409 = vmatprep.subr.bf16.mxu0 0
  %410 = vmatpush1.bf16.msra.mxu0 %v374
  %411 = vmatprep.subr.bf16.mxu0 0
  %412 = vmatpush1.bf16.msra.mxu0 %v375
  %413 = vmatprep.subr.bf16.mxu0 0
  %414 = vmatpush1.bf16.msra.mxu0 %v376
  %415 = vmatprep.subr.bf16.mxu0 0
  %416 = vmatpush1.bf16.msra.mxu0 %v377
  %417 = vmatprep.subr.bf16.mxu0 0
  %418 = vmatpush1.bf16.msra.mxu0 %v378
  %419 = vmatprep.subr.bf16.mxu0 0
  %420 = vmatpush1.bf16.msra.mxu0 %v379
  %421 = vmatprep.subr.bf16.mxu0 0
  %422 = vmatpush1.bf16.msra.mxu0 %v380
  %423 = vmatprep.subr.bf16.mxu0 0
  %424 = vmatpush1.bf16.msra.mxu0 %v381
  %425 = vmatprep.subr.bf16.mxu0 0
  %426 = vmatpush1.bf16.msra.mxu0 %v382
  %427 = vmatprep.subr.bf16.mxu0 0
  %428 = vmatpush1.bf16.msra.mxu0 %v383
  %429 = vmatprep.subr.bf16.mxu0 0
  %430 = vmatpush1.bf16.msra.mxu0 %v384
  %431 = vmatprep.subr.bf16.mxu0 0
  %432 = vmatpush1.bf16.msra.mxu0 %v385
  %433 = vmatprep.subr.bf16.mxu0 0
  %434 = vmatpush1.bf16.msra.mxu0 %v386
  %435 = vmatprep.mubr.bf16.mxu0 %v244
  %436 = vmatmul.mubr.bf16.gmra.mrb[0].mxu0 %v243
  %v437 = vpop.f32.mrb[0].mxu0
  %v438 = vadd.f32 0.0, %v437
  %v439 = vpop.f32.mrb[0].mxu0
  %v440 = vpop.f32.mrb[0].mxu0
  %v441 = vadd.f32 0.0, %v440
  %v442 = vpop.f32.mrb[0].mxu0
  %443 = vmatprep.mubr.bf16.mxu0 %v246
  %444 = vmatmul.mubr.bf16.gmra.mrb[0].mxu0 %v245
  %v445 = vpop.f32.mrb[0].mxu0
  %v446 = vadd.f32 0.0, %v445
  %v447 = vpop.f32.mrb[0].mxu0
  %v448 = vpop.f32.mrb[0].mxu0
  %v449 = vadd.f32 0.0, %v448
  %v450 = vpop.f32.mrb[0].mxu0
  %451 = vmatprep.mubr.bf16.mxu0 %v248
  %452 = vmatmul.mubr.bf16.gmra.mrb[0].mxu0 %v247
  %v453 = vpop.f32.mrb[0].mxu0
  %v454 = vadd.f32 0.0, %v453
  %v455 = vpop.f32.mrb[0].mxu0
  %v456 = vpop.f32.mrb[0].mxu0
  %v457 = vadd.f32 0.0, %v456
  %v458 = vpop.f32.mrb[0].mxu0
  %459 = vmatprep.mubr.bf16.mxu0 %v250
  %460 = vmatmul.mubr.bf16.gmra.mrb[0].mxu0 %v249
  %v461 = vpop.f32.mrb[0].mxu0
  %v462 = vadd.f32 0.0, %v461
  %v463 = vpop.f32.mrb[0].mxu0
  %v464 = vpop.f32.mrb[0].mxu0
  %v465 = vadd.f32 0.0, %v464
  %v466 = vpop.f32.mrb[0].mxu0
  %467 = vmatprep.mubr.bf16.mxu0 %v252
  %468 = vmatmul.mubr.bf16.gmra.mrb[0].mxu0 %v251
  %v469 = vpop.f32.mrb[0].mxu0
  %v470 = vadd.f32 0.0, %v469
  %v471 = vpop.f32.mrb[0].mxu0
  %v472 = vpop.f32.mrb[0].mxu0
  %v473 = vadd.f32 0.0, %v472
  %v474 = vpop.f32.mrb[0].mxu0
  %475 = vmatprep.mubr.bf16.mxu0 %v254
  %476 = vmatmul.mubr.bf16.gmra.mrb[0].mxu0 %v253
  %v477 = vpop.f32.mrb[0].mxu0
  %v478 = vadd.f32 0.0, %v477
  %v479 = vpop.f32.mrb[0].mxu0
  %v480 = vpop.f32.mrb[0].mxu0
  %v481 = vadd.f32 0.0, %v480
  %v482 = vpop.f32.mrb[0].mxu0
  %483 = vmatprep.mubr.bf16.mxu0 %v256
  %484 = vmatmul.mubr.bf16.gmra.mrb[0].mxu0 %v255
  %v485 = vpop.f32.mrb[0].mxu0
  %v486 = vadd.f32 0.0, %v485
  %v487 = vpop.f32.mrb[0].mxu0
  %v488 = vpop.f32.mrb[0].mxu0
  %v489 = vadd.f32 0.0, %v488
  %v490 = vpop.f32.mrb[0].mxu0
  %491 = vmatprep.mubr.bf16.mxu0 %v258
  %492 = vmatmul.mubr.bf16.gmra.mrb[0].mxu0 %v257
  %v493 = vpop.f32.mrb[0].mxu0
  %v494 = vadd.f32 0.0, %v493
  %v495 = vpop.f32.mrb[0].mxu0
  %v496 = vpop.f32.mrb[0].mxu0
  %v497 = vadd.f32 0.0, %v496
  %v498 = vpop.f32.mrb[0].mxu0
  %499 = vmatprep.mubr.bf16.mxu0 %v260
  %500 = vmatmul.mubr.bf16.gmra.mrb[0].mxu0 %v259
  %v501 = vpop.f32.mrb[0].mxu0
  %v502 = vadd.f32 0.0, %v501
  %v503 = vpop.f32.mrb[0].mxu0
  %v504 = vpop.f32.mrb[0].mxu0
  %v505 = vadd.f32 0.0, %v504
  %v506 = vpop.f32.mrb[0].mxu0
  %507 = vmatprep.mubr.bf16.mxu0 %v262
  %508 = vmatmul.mubr.bf16.gmra.mrb[0].mxu0 %v261
  %v509 = vpop.f32.mrb[0].mxu0
  %v510 = vadd.f32 0.0, %v509
  %v511 = vpop.f32.mrb[0].mxu0
  %v512 = vpop.f32.mrb[0].mxu0
  %v513 = vadd.f32 0.0, %v512
  %v514 = vpop.f32.mrb[0].mxu0
  %515 = vmatprep.mubr.bf16.mxu0 %v264
  %516 = vmatmul.mubr.bf16.gmra.mrb[0].mxu0 %v263
  %v517 = vpop.f32.mrb[0].mxu0
  %v518 = vadd.f32 0.0, %v517
  %v519 = vpop.f32.mrb[0].mxu0
  %v520 = vpop.f32.mrb[0].mxu0
  %v521 = vadd.f32 0.0, %v520
  %v522 = vpop.f32.mrb[0].mxu0
  %523 = vmatprep.mubr.bf16.mxu0 %v266
  %524 = vmatmul.mubr.bf16.gmra.mrb[0].mxu0 %v265
  %v525 = vpop.f32.mrb[0].mxu0
  %v526 = vadd.f32 0.0, %v525
  %v527 = vpop.f32.mrb[0].mxu0
  %v528 = vpop.f32.mrb[0].mxu0
  %v529 = vadd.f32 0.0, %v528
  %v530 = vpop.f32.mrb[0].mxu0
  %531 = vmatprep.mubr.bf16.mxu0 %v268
  %532 = vmatmul.mubr.bf16.gmra.mrb[0].mxu0 %v267
  %v533 = vpop.f32.mrb[0].mxu0
  %v534 = vadd.f32 0.0, %v533
  %v535 = vpop.f32.mrb[0].mxu0
  %v536 = vpop.f32.mrb[0].mxu0
  %v537 = vadd.f32 0.0, %v536
  %v538 = vpop.f32.mrb[0].mxu0
  %539 = vmatprep.mubr.bf16.mxu0 %v270
  %540 = vmatmul.mubr.bf16.gmra.mrb[0].mxu0 %v269
  %v541 = vpop.f32.mrb[0].mxu0
  %v542 = vadd.f32 0.0, %v541
  %v543 = vpop.f32.mrb[0].mxu0
  %v544 = vpop.f32.mrb[0].mxu0
  %v545 = vadd.f32 0.0, %v544
  %v546 = vpop.f32.mrb[0].mxu0
  %547 = vmatprep.mubr.bf16.mxu0 %v272
  %548 = vmatmul.mubr.bf16.gmra.mrb[0].mxu0 %v271
  %v549 = vpop.f32.mrb[0].mxu0
  %v550 = vadd.f32 0.0, %v549
  %v551 = vpop.f32.mrb[0].mxu0
  %v552 = vpop.f32.mrb[0].mxu0
  %v553 = vadd.f32 0.0, %v552
  %v554 = vpop.f32.mrb[0].mxu0
  %555 = vmatprep.mubr.bf16.mxu0 %v274
  %556 = vmatmul.mubr.bf16.gmra.mrb[0].mxu0 %v273
  %v557 = vpop.f32.mrb[0].mxu0
  %v558 = vadd.f32 0.0, %v557
  %v559 = vpop.f32.mrb[0].mxu0
  %v560 = vpop.f32.mrb[0].mxu0
  %v561 = vadd.f32 0.0, %v560
  %v562 = vpop.f32.mrb[0].mxu0
  %563 = vdwg.mxu0
  %v564 = vadd.f32 %v48, %v438
  %v565 = vadd.f32 %v49, %v441
  %v566 = vadd.f32 %v50, %v446
  %v567 = vadd.f32 %v51, %v449
  %v568 = vadd.f32 %v52, %v454
  %v569 = vadd.f32 %v53, %v457
  %v570 = vadd.f32 %v54, %v462
  %v571 = vadd.f32 %v55, %v465
  %v572 = vadd.f32 %v56, %v470
  %v573 = vadd.f32 %v57, %v473
  %v574 = vadd.f32 %v58, %v478
  %v575 = vadd.f32 %v59, %v481
  %v576 = vadd.f32 %v60, %v486
  %v577 = vadd.f32 %v61, %v489
  %v578 = vadd.f32 %v62, %v494
  %v579 = vadd.f32 %v63, %v497
  %v580 = vadd.f32 %v64, %v502
  %v581 = vadd.f32 %v65, %v505
  %v582 = vadd.f32 %v66, %v510
  %v583 = vadd.f32 %v67, %v513
  %v584 = vadd.f32 %v68, %v518
  %v585 = vadd.f32 %v69, %v521
  %v586 = vadd.f32 %v70, %v526
  %v587 = vadd.f32 %v71, %v529
  %v588 = vadd.f32 %v72, %v534
  %v589 = vadd.f32 %v73, %v537
  %v590 = vadd.f32 %v74, %v542
  %v591 = vadd.f32 %v75, %v545
  %v592 = vadd.f32 %v76, %v550
  %v593 = vadd.f32 %v77, %v553
  %v594 = vadd.f32 %v78, %v558
  %v595 = vadd.f32 %v79, %v561
  %596 = vst [vmem:[#allocation2] sm:$0xff] %v564
  %597 = vst [vmem:[#allocation2 + $0x8] sm:$0xff] %v565
  %598 = vst [vmem:[#allocation2 + $0x10] sm:$0xff] %v566
  %599 = vst [vmem:[#allocation2 + $0x18] sm:$0xff] %v567
  %600 = vst [vmem:[#allocation2 + $0x20] sm:$0xff] %v568
  %601 = vst [vmem:[#allocation2 + $0x28] sm:$0xff] %v569
  %602 = vst [vmem:[#allocation2 + $0x30] sm:$0xff] %v570
  %603 = vst [vmem:[#allocation2 + $0x38] sm:$0xff] %v571
  %604 = vst [vmem:[#allocation2 + $0x40] sm:$0xff] %v572
  %605 = vst [vmem:[#allocation2 + $0x48] sm:$0xff] %v573
  %606 = vst [vmem:[#allocation2 + $0x50] sm:$0xff] %v574
  %607 = vst [vmem:[#allocation2 + $0x58] sm:$0xff] %v575
  %608 = vst [vmem:[#allocation2 + $0x60] sm:$0xff] %v576
  %609 = vst [vmem:[#allocation2 + $0x68] sm:$0xff] %v577
  %610 = vst [vmem:[#allocation2 + $0x70] sm:$0xff] %v578
  %611 = vst [vmem:[#allocation2 + $0x78] sm:$0xff] %v579
  %612 = vst [vmem:[#allocation2 + $0x80] sm:$0xff] %v580
  %613 = vst [vmem:[#allocation2 + $0x88] sm:$0xff] %v581
  %614 = vst [vmem:[#allocation2 + $0x90] sm:$0xff] %v582
  %615 = vst [vmem:[#allocation2 + $0x98] sm:$0xff] %v583
  %616 = vst [vmem:[#allocation2 + $0xa0] sm:$0xff] %v584
  %617 = vst [vmem:[#allocation2 + $0xa8] sm:$0xff] %v585
  %618 = vst [vmem:[#allocation2 + $0xb0] sm:$0xff] %v586
  %619 = vst [vmem:[#allocation2 + $0xb8] sm:$0xff] %v587
  %620 = vst [vmem:[#allocation2 + $0xc0] sm:$0xff] %v588
  %621 = vst [vmem:[#allocation2 + $0xc8] sm:$0xff] %v589
  %622 = vst [vmem:[#allocation2 + $0xd0] sm:$0xff] %v590
  %623 = vst [vmem:[#allocation2 + $0xd8] sm:$0xff] %v591
  %624 = vst [vmem:[#allocation2 + $0xe0] sm:$0xff] %v592
  %625 = vst [vmem:[#allocation2 + $0xe8] sm:$0xff] %v593
  %626 = vst [vmem:[#allocation2 + $0xf0] sm:$0xff] %v594
  %627 = vst [vmem:[#allocation2 + $0xf8] sm:$0xff] %v595
  // Predicated region
  $region14: #{hgnn_time_forward.2} parent=0 // pred_check
    %p628 = pneg %p12
  $region15: #{hgnn_time_forward.2} parent=0 // pred_check_branch
    %630 = sbr.rel (%p628) target = $region17
  $region16: #{hgnn_time_forward.2} parent=0 // pred_region
    %v631 = vld [vmem:[#allocation2] sm:$0xff]
    %v632 = vld [vmem:[#allocation2 + $0x8] sm:$0xff]
    %v633 = vld [vmem:[#allocation2 + $0x10] sm:$0xff]
    %v634 = vld [vmem:[#allocation2 + $0x18] sm:$0xff]
    %v635 = vld [vmem:[#allocation2 + $0x20] sm:$0xff]
    %v636 = vld [vmem:[#allocation2 + $0x28] sm:$0xff]
    %v637 = vld [vmem:[#allocation2 + $0x30] sm:$0xff]
    %v638 = vld [vmem:[#allocation2 + $0x38] sm:$0xff]
    %v639 = vld [vmem:[#allocation2 + $0x40] sm:$0xff]
    %v640 = vld [vmem:[#allocation2 + $0x48] sm:$0xff]
    %v641 = vld [vmem:[#allocation2 + $0x50] sm:$0xff]
    %v642 = vld [vmem:[#allocation2 + $0x58] sm:$0xff]
    %v643 = vld [vmem:[#allocation2 + $0x60] sm:$0xff]
    %v644 = vld [vmem:[#allocation2 + $0x68] sm:$0xff]
    %v645 = vld [vmem:[#allocation2 + $0x70] sm:$0xff]
    %v646 = vld [vmem:[#allocation2 + $0x78] sm:$0xff]
    %v647 = vld [vmem:[#allocation2 + $0x80] sm:$0xff]
    %v648 = vld [vmem:[#allocation2 + $0x88] sm:$0xff]
    %v649 = vld [vmem:[#allocation2 + $0x90] sm:$0xff]
    %v650 = vld [vmem:[#allocation2 + $0x98] sm:$0xff]
    %v651 = vld [vmem:[#allocation2 + $0xa0] sm:$0xff]
    %v652 = vld [vmem:[#allocation2 + $0xa8] sm:$0xff]
    %v653 = vld [vmem:[#allocation2 + $0xb0] sm:$0xff]
    %v654 = vld [vmem:[#allocation2 + $0xb8] sm:$0xff]
    %v655 = vld [vmem:[#allocation2 + $0xc0] sm:$0xff]
    %v656 = vld [vmem:[#allocation2 + $0xc8] sm:$0xff]
    %v657 = vld [vmem:[#allocation2 + $0xd0] sm:$0xff]
    %v658 = vld [vmem:[#allocation2 + $0xd8] sm:$0xff]
    %v659 = vld [vmem:[#allocation2 + $0xe0] sm:$0xff]
    %v660 = vld [vmem:[#allocation2 + $0xe8] sm:$0xff]
    %v661 = vld [vmem:[#allocation2 + $0xf0] sm:$0xff]
    %v662 = vld [vmem:[#allocation2 + $0xf8] sm:$0xff]
    %v663 = vmax.f32 %v631, 0.0
    %v664 = vmax.f32 %v632, 0.0
    %v665 = vmax.f32 %v633, 0.0
    %v666 = vmax.f32 %v634, 0.0
    %v667 = vmax.f32 %v635, 0.0
    %v668 = vmax.f32 %v636, 0.0
    %v669 = vmax.f32 %v637, 0.0
    %v670 = vmax.f32 %v638, 0.0
    %v671 = vmax.f32 %v639, 0.0
    %v672 = vmax.f32 %v640, 0.0
    %v673 = vmax.f32 %v641, 0.0
    %v674 = vmax.f32 %v642, 0.0
    %v675 = vmax.f32 %v643, 0.0
    %v676 = vmax.f32 %v644, 0.0
    %v677 = vmax.f32 %v645, 0.0
    %v678 = vmax.f32 %v646, 0.0
    %v679 = vmax.f32 %v647, 0.0
    %v680 = vmax.f32 %v648, 0.0
    %v681 = vmax.f32 %v649, 0.0
    %v682 = vmax.f32 %v650, 0.0
    %v683 = vmax.f32 %v651, 0.0
    %v684 = vmax.f32 %v652, 0.0
    %v685 = vmax.f32 %v653, 0.0
    %v686 = vmax.f32 %v654, 0.0
    %v687 = vmax.f32 %v655, 0.0
    %v688 = vmax.f32 %v656, 0.0
    %v689 = vmax.f32 %v657, 0.0
    %v690 = vmax.f32 %v658, 0.0
    %v691 = vmax.f32 %v659, 0.0
    %v692 = vmax.f32 %v660, 0.0
    %v693 = vmax.f32 %v661, 0.0
    %v694 = vmax.f32 %v662, 0.0
    %v695 = vpack.c.bf16 %v664, %v663
    %v696 = vpack.c.bf16 %v666, %v665
    %v697 = vpack.c.bf16 %v668, %v667
    %v698 = vpack.c.bf16 %v670, %v669
    %v699 = vpack.c.bf16 %v672, %v671
    %v700 = vpack.c.bf16 %v674, %v673
    %v701 = vpack.c.bf16 %v676, %v675
    %v702 = vpack.c.bf16 %v678, %v677
    %v703 = vpack.c.bf16 %v680, %v679
    %v704 = vpack.c.bf16 %v682, %v681
    %v705 = vpack.c.bf16 %v684, %v683
    %v706 = vpack.c.bf16 %v686, %v685
    %v707 = vpack.c.bf16 %v688, %v687
    %v708 = vpack.c.bf16 %v690, %v689
    %v709 = vpack.c.bf16 %v692, %v691
    %v710 = vpack.c.bf16 %v694, %v693
    %v727 = vunpack.c.l.b16 %v695
    %v728 = vunpack.c.h.b16 %v695
    %v729 = vunpack.c.l.b16 %v696
    %v730 = vunpack.c.h.b16 %v696
    %v731 = vunpack.c.l.b16 %v697
    %v732 = vunpack.c.h.b16 %v697
    %v733 = vunpack.c.l.b16 %v698
    %v734 = vunpack.c.h.b16 %v698
    %v735 = vunpack.c.l.b16 %v699
    %v736 = vunpack.c.h.b16 %v699
    %v737 = vunpack.c.l.b16 %v700
    %v738 = vunpack.c.h.b16 %v700
    %v739 = vunpack.c.l.b16 %v701
    %v740 = vunpack.c.h.b16 %v701
    %v741 = vunpack.c.l.b16 %v702
    %v742 = vunpack.c.h.b16 %v702
    %v743 = vunpack.c.l.b16 %v703
    %v744 = vunpack.c.h.b16 %v703
    %v745 = vunpack.c.l.b16 %v704
    %v746 = vunpack.c.h.b16 %v704
    %v747 = vunpack.c.l.b16 %v705
    %v748 = vunpack.c.h.b16 %v705
    %v749 = vunpack.c.l.b16 %v706
    %v750 = vunpack.c.h.b16 %v706
    %v751 = vunpack.c.l.b16 %v707
    %v752 = vunpack.c.h.b16 %v707
    %v753 = vunpack.c.l.b16 %v708
    %v754 = vunpack.c.h.b16 %v708
    %v755 = vunpack.c.l.b16 %v709
    %v756 = vunpack.c.h.b16 %v709
    %v757 = vunpack.c.l.b16 %v710
    %v758 = vunpack.c.h.b16 %v710
    %v759 = vpack.c.b16 %v727, %v727
    %v760 = vpack.c.b16 %v728, %v728
    %v761 = vpack.c.b16 %v729, %v729
    %v762 = vpack.c.b16 %v730, %v730
    %v763 = vpack.c.b16 %v731, %v731
    %v764 = vpack.c.b16 %v732, %v732
    %v765 = vpack.c.b16 %v733, %v733
    %v766 = vpack.c.b16 %v734, %v734
    %v767 = vpack.c.b16 %v735, %v735
    %v768 = vpack.c.b16 %v736, %v736
    %v769 = vpack.c.b16 %v737, %v737
    %v770 = vpack.c.b16 %v738, %v738
    %v771 = vpack.c.b16 %v739, %v739
    %v772 = vpack.c.b16 %v740, %v740
    %v773 = vpack.c.b16 %v741, %v741
    %v774 = vpack.c.b16 %v742, %v742
    %v775 = vpack.c.b16 %v743, %v743
    %v776 = vpack.c.b16 %v744, %v744
    %v777 = vpack.c.b16 %v745, %v745
    %v778 = vpack.c.b16 %v746, %v746
    %v779 = vpack.c.b16 %v747, %v747
    %v780 = vpack.c.b16 %v748, %v748
    %v781 = vpack.c.b16 %v749, %v749
    %v782 = vpack.c.b16 %v750, %v750
    %v783 = vpack.c.b16 %v751, %v751
    %v784 = vpack.c.b16 %v752, %v752
    %v785 = vpack.c.b16 %v753, %v753
    %v786 = vpack.c.b16 %v754, %v754
    %v787 = vpack.c.b16 %v755, %v755
    %v788 = vpack.c.b16 %v756, %v756
    %v789 = vpack.c.b16 %v757, %v757
    %v790 = vpack.c.b16 %v758, %v758
    %823 = vst [vmem:[%s2] sm:$0xf] %v759
    %824 = vst [vmem:[%s2 + $0x4] sm:$0xf] %v760
    %825 = vst [vmem:[%s2 + $0x8] sm:$0xf] %v761
    %826 = vst [vmem:[%s2 + $0xc] sm:$0xf] %v762
    %827 = vst [vmem:[%s2 + $0x10] sm:$0xf] %v763
    %828 = vst [vmem:[%s2 + $0x14] sm:$0xf] %v764
    %829 = vst [vmem:[%s2 + $0x18] sm:$0xf] %v765
    %830 = vst [vmem:[%s2 + $0x1c] sm:$0xf] %v766
    %831 = vst [vmem:[%s2 + $0x20] sm:$0xf] %v767
    %832 = vst [vmem:[%s2 + $0x24] sm:$0xf] %v768
    %833 = vst [vmem:[%s2 + $0x28] sm:$0xf] %v769
    %834 = vst [vmem:[%s2 + $0x2c] sm:$0xf] %v770
    %835 = vst [vmem:[%s2 + $0x30] sm:$0xf] %v771
    %836 = vst [vmem:[%s2 + $0x34] sm:$0xf] %v772
    %837 = vst [vmem:[%s2 + $0x38] sm:$0xf] %v773
    %838 = vst [vmem:[%s2 + $0x3c] sm:$0xf] %v774
    %839 = vst [vmem:[%s2 + $0x40] sm:$0xf] %v775
    %840 = vst [vmem:[%s2 + $0x44] sm:$0xf] %v776
    %841 = vst [vmem:[%s2 + $0x48] sm:$0xf] %v777
    %842 = vst [vmem:[%s2 + $0x4c] sm:$0xf] %v778
    %843 = vst [vmem:[%s2 + $0x50] sm:$0xf] %v779
    %844 = vst [vmem:[%s2 + $0x54] sm:$0xf] %v780
    %845 = vst [vmem:[%s2 + $0x58] sm:$0xf] %v781
    %846 = vst [vmem:[%s2 + $0x5c] sm:$0xf] %v782
    %847 = vst [vmem:[%s2 + $0x60] sm:$0xf] %v783
    %848 = vst [vmem:[%s2 + $0x64] sm:$0xf] %v784
    %849 = vst [vmem:[%s2 + $0x68] sm:$0xf] %v785
    %850 = vst [vmem:[%s2 + $0x6c] sm:$0xf] %v786
    %851 = vst [vmem:[%s2 + $0x70] sm:$0xf] %v787
    %852 = vst [vmem:[%s2 + $0x74] sm:$0xf] %v788
    %853 = vst [vmem:[%s2 + $0x78] sm:$0xf] %v789
    %854 = vst [vmem:[%s2 + $0x7c] sm:$0xf] %v790
  $region17: #{hgnn_time_forward.2} parent=0 // pred_fallthru
    _
  // Predicated region
  $region18: #{hgnn_time_forward.2} parent=0 // pred_check
    _
  $region19: #{hgnn_time_forward.2} parent=0 // pred_check_branch
    %856 = sbr.rel (0) target = $region21
  $region20: #{hgnn_time_forward.2} parent=0 // pred_region
    _
  $region21: #{hgnn_time_forward.2} parent=0 // pred_fallthru
    _
  // Predicated region
  $region22: #{hgnn_time_forward.2} parent=0 // pred_check
    _
  $region23: #{hgnn_time_forward.2} parent=0 // pred_check_branch
    %858 = sbr.rel (0) target = $region25
  $region24: #{hgnn_time_forward.2} parent=0 // pred_region
    _
  $region25: #{hgnn_time_forward.2} parent=0 // pred_fallthru
    _

// kernel: hgnn_time_forward.3
$region0: #{hgnn_time_forward.3}
  #allocation0 [shape = 'u32[]', space=smem, size = 0x4, offset = 0x4, fixed_abs, tag = 'smem constant byte address 0x4 - core index']
  #allocation1 [shape = 'u32[144,128]{1,0:T(1,128)}', space=vmem, size = 0x12000, scoped, tag = 'internal scratch']
  #allocation2 [shape = 'f32[256,128]{1,0:T(8,128)}', space=vmem, size = 0x20000, scoped, tag = 'scratch operand']
  %s0 = inlined_call_operand.vmem [shape: bf16[256,256], index: 0, kind: input, shape index: {}]
  %s1 = inlined_call_operand.vmem [shape: bf16[1,256,128], index: 1, kind: input, shape index: {}]
  %s2 = inlined_call_operand.vmem [shape: bf16[128,128], index: 2, kind: input, shape index: {}]
  %s3 = inlined_call_operand.vmem [shape: f32[1,128], index: 3, kind: input, shape index: {}]
  %s4 = inlined_call_operand.vmem [shape: f32[256,128], index: 4, kind: output, shape index: {}]
  %s5 = sld [smem:[#allocation0]]
  $region34: #{hgnn_time_forward.3} parent=0
    _
  %s7 = ssub.s32 1, %s5
  %s8 = scalar_select 0, %s7, %s5
  // Predicated region
  $region2: #{hgnn_time_forward.3} parent=0 // pred_check
    _
  $region3: #{hgnn_time_forward.3} parent=0 // pred_check_branch
    %10 = sbr.rel (0) target = $region5
  $region4: #{hgnn_time_forward.3} parent=0 // pred_region
    _
  $region5: #{hgnn_time_forward.3} parent=0 // pred_fallthru
    _
  // Predicated region
  $region6: #{hgnn_time_forward.3} parent=0 // pred_check
    _
  $region7: #{hgnn_time_forward.3} parent=0 // pred_check_branch
    %12 = sbr.rel (0) target = $region9
  $region8: #{hgnn_time_forward.3} parent=0 // pred_region
    _
  $region9: #{hgnn_time_forward.3} parent=0 // pred_fallthru
    _
  // Predicated region
  $region10: #{hgnn_time_forward.3} parent=0 // pred_check
    _
  $region11: #{hgnn_time_forward.3} parent=0 // pred_check_branch
    %14 = sbr.rel (0) target = $region13
  $region12: #{hgnn_time_forward.3} parent=0 // pred_region
    _
  $region13: #{hgnn_time_forward.3} parent=0 // pred_fallthru
    _
  // Predicated region
  $region14: #{hgnn_time_forward.3} parent=0 // pred_check
    _
  $region15: #{hgnn_time_forward.3} parent=0 // pred_check_branch
    %16 = sbr.rel (0) target = $region17
  $region16: #{hgnn_time_forward.3} parent=0 // pred_region
    _
  $region17: #{hgnn_time_forward.3} parent=0 // pred_fallthru
    _
  %p18 = scmp.eq.s32.totalorder 0, 0
  // Predicated region
  $region18: #{hgnn_time_forward.3} parent=0 // pred_check
    %p19 = pneg %p18
  $region19: #{hgnn_time_forward.3} parent=0 // pred_check_branch
    %21 = sbr.rel (%p19) target = $region21
  $region20: #{hgnn_time_forward.3} parent=0 // pred_region
    %22 = vst [vmem:[#allocation2] sm:$0xff] 0.0
    %23 = vst [vmem:[#allocation2 + $0x8] sm:$0xff] 0.0
    %24 = vst [vmem:[#allocation2 + $0x10] sm:$0xff] 0.0
    %25 = vst [vmem:[#allocation2 + $0x18] sm:$0xff] 0.0
    %26 = vst [vmem:[#allocation2 + $0x20] sm:$0xff] 0.0
    %27 = vst [vmem:[#allocation2 + $0x28] sm:$0xff] 0.0
    %28 = vst [vmem:[#allocation2 + $0x30] sm:$0xff] 0.0
    %29 = vst [vmem:[#allocation2 + $0x38] sm:$0xff] 0.0
    %30 = vst [vmem:[#allocation2 + $0x40] sm:$0xff] 0.0
    %31 = vst [vmem:[#allocation2 + $0x48] sm:$0xff] 0.0
    %32 = vst [vmem:[#allocation2 + $0x50] sm:$0xff] 0.0
    %33 = vst [vmem:[#allocation2 + $0x58] sm:$0xff] 0.0
    %34 = vst [vmem:[#allocation2 + $0x60] sm:$0xff] 0.0
    %35 = vst [vmem:[#allocation2 + $0x68] sm:$0xff] 0.0
    %36 = vst [vmem:[#allocation2 + $0x70] sm:$0xff] 0.0
    %37 = vst [vmem:[#allocation2 + $0x78] sm:$0xff] 0.0
    %38 = vst [vmem:[#allocation2 + $0x80] sm:$0xff] 0.0
    %39 = vst [vmem:[#allocation2 + $0x88] sm:$0xff] 0.0
    %40 = vst [vmem:[#allocation2 + $0x90] sm:$0xff] 0.0
    %41 = vst [vmem:[#allocation2 + $0x98] sm:$0xff] 0.0
    %42 = vst [vmem:[#allocation2 + $0xa0] sm:$0xff] 0.0
    %43 = vst [vmem:[#allocation2 + $0xa8] sm:$0xff] 0.0
    %44 = vst [vmem:[#allocation2 + $0xb0] sm:$0xff] 0.0
    %45 = vst [vmem:[#allocation2 + $0xb8] sm:$0xff] 0.0
    %46 = vst [vmem:[#allocation2 + $0xc0] sm:$0xff] 0.0
    %47 = vst [vmem:[#allocation2 + $0xc8] sm:$0xff] 0.0
    %48 = vst [vmem:[#allocation2 + $0xd0] sm:$0xff] 0.0
    %49 = vst [vmem:[#allocation2 + $0xd8] sm:$0xff] 0.0
    %50 = vst [vmem:[#allocation2 + $0xe0] sm:$0xff] 0.0
    %51 = vst [vmem:[#allocation2 + $0xe8] sm:$0xff] 0.0
    %52 = vst [vmem:[#allocation2 + $0xf0] sm:$0xff] 0.0
    %53 = vst [vmem:[#allocation2 + $0xf8] sm:$0xff] 0.0
  $region21: #{hgnn_time_forward.3} parent=0 // pred_fallthru
    _
  %v54 = vld [vmem:[#allocation2] sm:$0xff]
  %v55 = vld [vmem:[#allocation2 + $0x8] sm:$0xff]
  %v56 = vld [vmem:[#allocation2 + $0x10] sm:$0xff]
  %v57 = vld [vmem:[#allocation2 + $0x18] sm:$0xff]
  %v58 = vld [vmem:[#allocation2 + $0x20] sm:$0xff]
  %v59 = vld [vmem:[#allocation2 + $0x28] sm:$0xff]
  %v60 = vld [vmem:[#allocation2 + $0x30] sm:$0xff]
  %v61 = vld [vmem:[#allocation2 + $0x38] sm:$0xff]
  %v62 = vld [vmem:[#allocation2 + $0x40] sm:$0xff]
  %v63 = vld [vmem:[#allocation2 + $0x48] sm:$0xff]
  %v64 = vld [vmem:[#allocation2 + $0x50] sm:$0xff]
  %v65 = vld [vmem:[#allocation2 + $0x58] sm:$0xff]
  %v66 = vld [vmem:[#allocation2 + $0x60] sm:$0xff]
  %v67 = vld [vmem:[#allocation2 + $0x68] sm:$0xff]
  %v68 = vld [vmem:[#allocation2 + $0x70] sm:$0xff]
  %v69 = vld [vmem:[#allocation2 + $0x78] sm:$0xff]
  %v70 = vld [vmem:[#allocation2 + $0x80] sm:$0xff]
  %v71 = vld [vmem:[#allocation2 + $0x88] sm:$0xff]
  %v72 = vld [vmem:[#allocation2 + $0x90] sm:$0xff]
  %v73 = vld [vmem:[#allocation2 + $0x98] sm:$0xff]
  %v74 = vld [vmem:[#allocation2 + $0xa0] sm:$0xff]
  %v75 = vld [vmem:[#allocation2 + $0xa8] sm:$0xff]
  %v76 = vld [vmem:[#allocation2 + $0xb0] sm:$0xff]
  %v77 = vld [vmem:[#allocation2 + $0xb8] sm:$0xff]
  %v78 = vld [vmem:[#allocation2 + $0xc0] sm:$0xff]
  %v79 = vld [vmem:[#allocation2 + $0xc8] sm:$0xff]
  %v80 = vld [vmem:[#allocation2 + $0xd0] sm:$0xff]
  %v81 = vld [vmem:[#allocation2 + $0xd8] sm:$0xff]
  %v82 = vld [vmem:[#allocation2 + $0xe0] sm:$0xff]
  %v83 = vld [vmem:[#allocation2 + $0xe8] sm:$0xff]
  %v84 = vld [vmem:[#allocation2 + $0xf0] sm:$0xff]
  %v85 = vld [vmem:[#allocation2 + $0xf8] sm:$0xff]
  %v86 = vld [vmem:[%s0] sm:$0xff]
  %v87 = vld [vmem:[%s0 + $0x8] sm:$0xff]
  %v88 = vld [vmem:[%s0 + $0x10] sm:$0xff]
  %v89 = vld [vmem:[%s0 + $0x18] sm:$0xff]
  %v90 = vld [vmem:[%s0 + $0x20] sm:$0xff]
  %v91 = vld [vmem:[%s0 + $0x28] sm:$0xff]
  %v92 = vld [vmem:[%s0 + $0x30] sm:$0xff]
  %v93 = vld [vmem:[%s0 + $0x38] sm:$0xff]
  %v94 = vld [vmem:[%s0 + $0x40] sm:$0xff]
  %v95 = vld [vmem:[%s0 + $0x48] sm:$0xff]
  %v96 = vld [vmem:[%s0 + $0x50] sm:$0xff]
  %v97 = vld [vmem:[%s0 + $0x58] sm:$0xff]
  %v98 = vld [vmem:[%s0 + $0x60] sm:$0xff]
  %v99 = vld [vmem:[%s0 + $0x68] sm:$0xff]
  %v100 = vld [vmem:[%s0 + $0x70] sm:$0xff]
  %v101 = vld [vmem:[%s0 + $0x78] sm:$0xff]
  %v102 = vld [vmem:[%s0 + $0x80] sm:$0xff]
  %v103 = vld [vmem:[%s0 + $0x88] sm:$0xff]
  %v104 = vld [vmem:[%s0 + $0x90] sm:$0xff]
  %v105 = vld [vmem:[%s0 + $0x98] sm:$0xff]
  %v106 = vld [vmem:[%s0 + $0xa0] sm:$0xff]
  %v107 = vld [vmem:[%s0 + $0xa8] sm:$0xff]
  %v108 = vld [vmem:[%s0 + $0xb0] sm:$0xff]
  %v109 = vld [vmem:[%s0 + $0xb8] sm:$0xff]
  %v110 = vld [vmem:[%s0 + $0xc0] sm:$0xff]
  %v111 = vld [vmem:[%s0 + $0xc8] sm:$0xff]
  %v112 = vld [vmem:[%s0 + $0xd0] sm:$0xff]
  %v113 = vld [vmem:[%s0 + $0xd8] sm:$0xff]
  %v114 = vld [vmem:[%s0 + $0xe0] sm:$0xff]
  %v115 = vld [vmem:[%s0 + $0xe8] sm:$0xff]
  %v116 = vld [vmem:[%s0 + $0xf0] sm:$0xff]
  %v117 = vld [vmem:[%s0 + $0xf8] sm:$0xff]
  %s118 = smul.u32 0, 32
  %s119 = smul.addr %s118, 4
  %s120 = scalar_lea.vmem %s1, %s119
  %v121 = vld [vmem:[%s120] sm:$0xf]
  %v122 = vld [vmem:[%s120 + $0x4] sm:$0xf]
  %v123 = vld [vmem:[%s120 + $0x8] sm:$0xf]
  %v124 = vld [vmem:[%s120 + $0xc] sm:$0xf]
  %v125 = vld [vmem:[%s120 + $0x10] sm:$0xf]
  %v126 = vld [vmem:[%s120 + $0x14] sm:$0xf]
  %v127 = vld [vmem:[%s120 + $0x18] sm:$0xf]
  %v128 = vld [vmem:[%s120 + $0x1c] sm:$0xf]
  %v129 = vld [vmem:[%s120 + $0x20] sm:$0xf]
  %v130 = vld [vmem:[%s120 + $0x24] sm:$0xf]
  %v131 = vld [vmem:[%s120 + $0x28] sm:$0xf]
  %v132 = vld [vmem:[%s120 + $0x2c] sm:$0xf]
  %v133 = vld [vmem:[%s120 + $0x30] sm:$0xf]
  %v134 = vld [vmem:[%s120 + $0x34] sm:$0xf]
  %v135 = vld [vmem:[%s120 + $0x38] sm:$0xf]
  %v136 = vld [vmem:[%s120 + $0x3c] sm:$0xf]
  %v137 = vld [vmem:[%s120 + $0x40] sm:$0xf]
  %v138 = vld [vmem:[%s120 + $0x44] sm:$0xf]
  %v139 = vld [vmem:[%s120 + $0x48] sm:$0xf]
  %v140 = vld [vmem:[%s120 + $0x4c] sm:$0xf]
  %v141 = vld [vmem:[%s120 + $0x50] sm:$0xf]
  %v142 = vld [vmem:[%s120 + $0x54] sm:$0xf]
  %v143 = vld [vmem:[%s120 + $0x58] sm:$0xf]
  %v144 = vld [vmem:[%s120 + $0x5c] sm:$0xf]
  %v145 = vld [vmem:[%s120 + $0x60] sm:$0xf]
  %v146 = vld [vmem:[%s120 + $0x64] sm:$0xf]
  %v147 = vld [vmem:[%s120 + $0x68] sm:$0xf]
  %v148 = vld [vmem:[%s120 + $0x6c] sm:$0xf]
  %v149 = vld [vmem:[%s120 + $0x70] sm:$0xf]
  %v150 = vld [vmem:[%s120 + $0x74] sm:$0xf]
  %v151 = vld [vmem:[%s120 + $0x78] sm:$0xf]
  %v152 = vld [vmem:[%s120 + $0x7c] sm:$0xf]
  %v185 = vunpack.c.l.b16 %v86
  %v186 = vunpack.c.h.b16 %v86
  %v187 = vunpack.c.l.b16 %v87
  %v188 = vunpack.c.h.b16 %v87
  %v189 = vunpack.c.l.b16 %v88
  %v190 = vunpack.c.h.b16 %v88
  %v191 = vunpack.c.l.b16 %v89
  %v192 = vunpack.c.h.b16 %v89
  %v193 = vunpack.c.l.b16 %v90
  %v194 = vunpack.c.h.b16 %v90
  %v195 = vunpack.c.l.b16 %v91
  %v196 = vunpack.c.h.b16 %v91
  %v197 = vunpack.c.l.b16 %v92
  %v198 = vunpack.c.h.b16 %v92
  %v199 = vunpack.c.l.b16 %v93
  %v200 = vunpack.c.h.b16 %v93
  %v201 = vunpack.c.l.b16 %v94
  %v202 = vunpack.c.h.b16 %v94
  %v203 = vunpack.c.l.b16 %v95
  %v204 = vunpack.c.h.b16 %v95
  %v205 = vunpack.c.l.b16 %v96
  %v206 = vunpack.c.h.b16 %v96
  %v207 = vunpack.c.l.b16 %v97
  %v208 = vunpack.c.h.b16 %v97
  %v209 = vunpack.c.l.b16 %v98
  %v210 = vunpack.c.h.b16 %v98
  %v211 = vunpack.c.l.b16 %v99
  %v212 = vunpack.c.h.b16 %v99
  %v213 = vunpack.c.l.b16 %v100
  %v214 = vunpack.c.h.b16 %v100
  %v215 = vunpack.c.l.b16 %v101
  %v216 = vunpack.c.h.b16 %v101
  %v217 = vunpack.c.l.b16 %v102
  %v218 = vunpack.c.h.b16 %v102
  %v219 = vunpack.c.l.b16 %v103
  %v220 = vunpack.c.h.b16 %v103
  %v221 = vunpack.c.l.b16 %v104
  %v222 = vunpack.c.h.b16 %v104
  %v223 = vunpack.c.l.b16 %v105
  %v224 = vunpack.c.h.b16 %v105
  %v225 = vunpack.c.l.b16 %v106
  %v226 = vunpack.c.h.b16 %v106
  %v227 = vunpack.c.l.b16 %v107
  %v228 = vunpack.c.h.b16 %v107
  %v229 = vunpack.c.l.b16 %v108
  %v230 = vunpack.c.h.b16 %v108
  %v231 = vunpack.c.l.b16 %v109
  %v232 = vunpack.c.h.b16 %v109
  %v233 = vunpack.c.l.b16 %v110
  %v234 = vunpack.c.h.b16 %v110
  %v235 = vunpack.c.l.b16 %v111
  %v236 = vunpack.c.h.b16 %v111
  %v237 = vunpack.c.l.b16 %v112
  %v238 = vunpack.c.h.b16 %v112
  %v239 = vunpack.c.l.b16 %v113
  %v240 = vunpack.c.h.b16 %v113
  %v241 = vunpack.c.l.b16 %v114
  %v242 = vunpack.c.h.b16 %v114
  %v243 = vunpack.c.l.b16 %v115
  %v244 = vunpack.c.h.b16 %v115
  %v245 = vunpack.c.l.b16 %v116
  %v246 = vunpack.c.h.b16 %v116
  %v247 = vunpack.c.l.b16 %v117
  %v248 = vunpack.c.h.b16 %v117
  %v249 = vpack.c.b16 %v187, %v185
  %v250 = vpack.c.b16 %v188, %v186
  %v251 = vpack.c.b16 %v191, %v189
  %v252 = vpack.c.b16 %v192, %v190
  %v253 = vpack.c.b16 %v195, %v193
  %v254 = vpack.c.b16 %v196, %v194
  %v255 = vpack.c.b16 %v199, %v197
  %v256 = vpack.c.b16 %v200, %v198
  %v257 = vpack.c.b16 %v203, %v201
  %v258 = vpack.c.b16 %v204, %v202
  %v259 = vpack.c.b16 %v207, %v205
  %v260 = vpack.c.b16 %v208, %v206
  %v261 = vpack.c.b16 %v211, %v209
  %v262 = vpack.c.b16 %v212, %v210
  %v263 = vpack.c.b16 %v215, %v213
  %v264 = vpack.c.b16 %v216, %v214
  %v265 = vpack.c.b16 %v219, %v217
  %v266 = vpack.c.b16 %v220, %v218
  %v267 = vpack.c.b16 %v223, %v221
  %v268 = vpack.c.b16 %v224, %v222
  %v269 = vpack.c.b16 %v227, %v225
  %v270 = vpack.c.b16 %v228, %v226
  %v271 = vpack.c.b16 %v231, %v229
  %v272 = vpack.c.b16 %v232, %v230
  %v273 = vpack.c.b16 %v235, %v233
  %v274 = vpack.c.b16 %v236, %v234
  %v275 = vpack.c.b16 %v239, %v237
  %v276 = vpack.c.b16 %v240, %v238
  %v277 = vpack.c.b16 %v243, %v241
  %v278 = vpack.c.b16 %v244, %v242
  %v279 = vpack.c.b16 %v247, %v245
  %v280 = vpack.c.b16 %v248, %v246
  %v345 = vunpack.c.l.b16 %v121
  %v346 = vunpack.c.l.b16 %v122
  %v347 = vunpack.c.l.b16 %v123
  %v348 = vunpack.c.l.b16 %v124
  %v349 = vunpack.c.l.b16 %v125
  %v350 = vunpack.c.l.b16 %v126
  %v351 = vunpack.c.l.b16 %v127
  %v352 = vunpack.c.l.b16 %v128
  %v353 = vunpack.c.l.b16 %v129
  %v354 = vunpack.c.l.b16 %v130
  %v355 = vunpack.c.l.b16 %v131
  %v356 = vunpack.c.l.b16 %v132
  %v357 = vunpack.c.l.b16 %v133
  %v358 = vunpack.c.l.b16 %v134
  %v359 = vunpack.c.l.b16 %v135
  %v360 = vunpack.c.l.b16 %v136
  %v361 = vunpack.c.l.b16 %v137
  %v362 = vunpack.c.l.b16 %v138
  %v363 = vunpack.c.l.b16 %v139
  %v364 = vunpack.c.l.b16 %v140
  %v365 = vunpack.c.l.b16 %v141
  %v366 = vunpack.c.l.b16 %v142
  %v367 = vunpack.c.l.b16 %v143
  %v368 = vunpack.c.l.b16 %v144
  %v369 = vunpack.c.l.b16 %v145
  %v370 = vunpack.c.l.b16 %v146
  %v371 = vunpack.c.l.b16 %v147
  %v372 = vunpack.c.l.b16 %v148
  %v373 = vunpack.c.l.b16 %v149
  %v374 = vunpack.c.l.b16 %v150
  %v375 = vunpack.c.l.b16 %v151
  %v376 = vunpack.c.l.b16 %v152
  %v377 = vpack.c.b16 %v346, %v345
  %v378 = vpack.c.b16 %v348, %v347
  %v379 = vpack.c.b16 %v350, %v349
  %v380 = vpack.c.b16 %v352, %v351
  %v381 = vpack.c.b16 %v354, %v353
  %v382 = vpack.c.b16 %v356, %v355
  %v383 = vpack.c.b16 %v358, %v357
  %v384 = vpack.c.b16 %v360, %v359
  %v385 = vpack.c.b16 %v362, %v361
  %v386 = vpack.c.b16 %v364, %v363
  %v387 = vpack.c.b16 %v366, %v365
  %v388 = vpack.c.b16 %v368, %v367
  %v389 = vpack.c.b16 %v370, %v369
  %v390 = vpack.c.b16 %v372, %v371
  %v391 = vpack.c.b16 %v374, %v373
  %v392 = vpack.c.b16 %v376, %v375
  %409 = vmatprep.subr.bf16.mxu0 0
  %410 = vmatpush1.bf16.msra.mxu0 %v377
  %411 = vmatprep.subr.bf16.mxu0 0
  %412 = vmatpush1.bf16.msra.mxu0 %v378
  %413 = vmatprep.subr.bf16.mxu0 0
  %414 = vmatpush1.bf16.msra.mxu0 %v379
  %415 = vmatprep.subr.bf16.mxu0 0
  %416 = vmatpush1.bf16.msra.mxu0 %v380
  %417 = vmatprep.subr.bf16.mxu0 0
  %418 = vmatpush1.bf16.msra.mxu0 %v381
  %419 = vmatprep.subr.bf16.mxu0 0
  %420 = vmatpush1.bf16.msra.mxu0 %v382
  %421 = vmatprep.subr.bf16.mxu0 0
  %422 = vmatpush1.bf16.msra.mxu0 %v383
  %423 = vmatprep.subr.bf16.mxu0 0
  %424 = vmatpush1.bf16.msra.mxu0 %v384
  %425 = vmatprep.subr.bf16.mxu0 0
  %426 = vmatpush1.bf16.msra.mxu0 %v385
  %427 = vmatprep.subr.bf16.mxu0 0
  %428 = vmatpush1.bf16.msra.mxu0 %v386
  %429 = vmatprep.subr.bf16.mxu0 0
  %430 = vmatpush1.bf16.msra.mxu0 %v387
  %431 = vmatprep.subr.bf16.mxu0 0
  %432 = vmatpush1.bf16.msra.mxu0 %v388
  %433 = vmatprep.subr.bf16.mxu0 0
  %434 = vmatpush1.bf16.msra.mxu0 %v389
  %435 = vmatprep.subr.bf16.mxu0 0
  %436 = vmatpush1.bf16.msra.mxu0 %v390
  %437 = vmatprep.subr.bf16.mxu0 0
  %438 = vmatpush1.bf16.msra.mxu0 %v391
  %439 = vmatprep.subr.bf16.mxu0 0
  %440 = vmatpush1.bf16.msra.mxu0 %v392
  %441 = vmatprep.mubr.bf16.mxu0 %v250
  %442 = vmatmul.mubr.bf16.gmra.mrb[0].mxu0 %v249
  %v443 = vpop.f32.mrb[0].mxu0
  %v444 = vadd.f32 0.0, %v443
  %v445 = vpop.f32.mrb[0].mxu0
  %v446 = vpop.f32.mrb[0].mxu0
  %v447 = vadd.f32 0.0, %v446
  %v448 = vpop.f32.mrb[0].mxu0
  %449 = vmatprep.mubr.bf16.mxu0 %v252
  %450 = vmatmul.mubr.bf16.gmra.mrb[0].mxu0 %v251
  %v451 = vpop.f32.mrb[0].mxu0
  %v452 = vadd.f32 0.0, %v451
  %v453 = vpop.f32.mrb[0].mxu0
  %v454 = vpop.f32.mrb[0].mxu0
  %v455 = vadd.f32 0.0, %v454
  %v456 = vpop.f32.mrb[0].mxu0
  %457 = vmatprep.mubr.bf16.mxu0 %v254
  %458 = vmatmul.mubr.bf16.gmra.mrb[0].mxu0 %v253
  %v459 = vpop.f32.mrb[0].mxu0
  %v460 = vadd.f32 0.0, %v459
  %v461 = vpop.f32.mrb[0].mxu0
  %v462 = vpop.f32.mrb[0].mxu0
  %v463 = vadd.f32 0.0, %v462
  %v464 = vpop.f32.mrb[0].mxu0
  %465 = vmatprep.mubr.bf16.mxu0 %v256
  %466 = vmatmul.mubr.bf16.gmra.mrb[0].mxu0 %v255
  %v467 = vpop.f32.mrb[0].mxu0
  %v468 = vadd.f32 0.0, %v467
  %v469 = vpop.f32.mrb[0].mxu0
  %v470 = vpop.f32.mrb[0].mxu0
  %v471 = vadd.f32 0.0, %v470
  %v472 = vpop.f32.mrb[0].mxu0
  %473 = vmatprep.mubr.bf16.mxu0 %v258
  %474 = vmatmul.mubr.bf16.gmra.mrb[0].mxu0 %v257
  %v475 = vpop.f32.mrb[0].mxu0
  %v476 = vadd.f32 0.0, %v475
  %v477 = vpop.f32.mrb[0].mxu0
  %v478 = vpop.f32.mrb[0].mxu0
  %v479 = vadd.f32 0.0, %v478
  %v480 = vpop.f32.mrb[0].mxu0
  %481 = vmatprep.mubr.bf16.mxu0 %v260
  %482 = vmatmul.mubr.bf16.gmra.mrb[0].mxu0 %v259
  %v483 = vpop.f32.mrb[0].mxu0
  %v484 = vadd.f32 0.0, %v483
  %v485 = vpop.f32.mrb[0].mxu0
  %v486 = vpop.f32.mrb[0].mxu0
  %v487 = vadd.f32 0.0, %v486
  %v488 = vpop.f32.mrb[0].mxu0
  %489 = vmatprep.mubr.bf16.mxu0 %v262
  %490 = vmatmul.mubr.bf16.gmra.mrb[0].mxu0 %v261
  %v491 = vpop.f32.mrb[0].mxu0
  %v492 = vadd.f32 0.0, %v491
  %v493 = vpop.f32.mrb[0].mxu0
  %v494 = vpop.f32.mrb[0].mxu0
  %v495 = vadd.f32 0.0, %v494
  %v496 = vpop.f32.mrb[0].mxu0
  %497 = vmatprep.mubr.bf16.mxu0 %v264
  %498 = vmatmul.mubr.bf16.gmra.mrb[0].mxu0 %v263
  %v499 = vpop.f32.mrb[0].mxu0
  %v500 = vadd.f32 0.0, %v499
  %v501 = vpop.f32.mrb[0].mxu0
  %v502 = vpop.f32.mrb[0].mxu0
  %v503 = vadd.f32 0.0, %v502
  %v504 = vpop.f32.mrb[0].mxu0
  %505 = vmatprep.mubr.bf16.mxu0 %v266
  %506 = vmatmul.mubr.bf16.gmra.mrb[0].mxu0 %v265
  %v507 = vpop.f32.mrb[0].mxu0
  %v508 = vadd.f32 0.0, %v507
  %v509 = vpop.f32.mrb[0].mxu0
  %v510 = vpop.f32.mrb[0].mxu0
  %v511 = vadd.f32 0.0, %v510
  %v512 = vpop.f32.mrb[0].mxu0
  %513 = vmatprep.mubr.bf16.mxu0 %v268
  %514 = vmatmul.mubr.bf16.gmra.mrb[0].mxu0 %v267
  %v515 = vpop.f32.mrb[0].mxu0
  %v516 = vadd.f32 0.0, %v515
  %v517 = vpop.f32.mrb[0].mxu0
  %v518 = vpop.f32.mrb[0].mxu0
  %v519 = vadd.f32 0.0, %v518
  %v520 = vpop.f32.mrb[0].mxu0
  %521 = vmatprep.mubr.bf16.mxu0 %v270
  %522 = vmatmul.mubr.bf16.gmra.mrb[0].mxu0 %v269
  %v523 = vpop.f32.mrb[0].mxu0
  %v524 = vadd.f32 0.0, %v523
  %v525 = vpop.f32.mrb[0].mxu0
  %v526 = vpop.f32.mrb[0].mxu0
  %v527 = vadd.f32 0.0, %v526
  %v528 = vpop.f32.mrb[0].mxu0
  %529 = vmatprep.mubr.bf16.mxu0 %v272
  %530 = vmatmul.mubr.bf16.gmra.mrb[0].mxu0 %v271
  %v531 = vpop.f32.mrb[0].mxu0
  %v532 = vadd.f32 0.0, %v531
  %v533 = vpop.f32.mrb[0].mxu0
  %v534 = vpop.f32.mrb[0].mxu0
  %v535 = vadd.f32 0.0, %v534
  %v536 = vpop.f32.mrb[0].mxu0
  %537 = vmatprep.mubr.bf16.mxu0 %v274
  %538 = vmatmul.mubr.bf16.gmra.mrb[0].mxu0 %v273
  %v539 = vpop.f32.mrb[0].mxu0
  %v540 = vadd.f32 0.0, %v539
  %v541 = vpop.f32.mrb[0].mxu0
  %v542 = vpop.f32.mrb[0].mxu0
  %v543 = vadd.f32 0.0, %v542
  %v544 = vpop.f32.mrb[0].mxu0
  %545 = vmatprep.mubr.bf16.mxu0 %v276
  %546 = vmatmul.mubr.bf16.gmra.mrb[0].mxu0 %v275
  %v547 = vpop.f32.mrb[0].mxu0
  %v548 = vadd.f32 0.0, %v547
  %v549 = vpop.f32.mrb[0].mxu0
  %v550 = vpop.f32.mrb[0].mxu0
  %v551 = vadd.f32 0.0, %v550
  %v552 = vpop.f32.mrb[0].mxu0
  %553 = vmatprep.mubr.bf16.mxu0 %v278
  %554 = vmatmul.mubr.bf16.gmra.mrb[0].mxu0 %v277
  %v555 = vpop.f32.mrb[0].mxu0
  %v556 = vadd.f32 0.0, %v555
  %v557 = vpop.f32.mrb[0].mxu0
  %v558 = vpop.f32.mrb[0].mxu0
  %v559 = vadd.f32 0.0, %v558
  %v560 = vpop.f32.mrb[0].mxu0
  %561 = vmatprep.mubr.bf16.mxu0 %v280
  %562 = vmatmul.mubr.bf16.gmra.mrb[0].mxu0 %v279
  %v563 = vpop.f32.mrb[0].mxu0
  %v564 = vadd.f32 0.0, %v563
  %v565 = vpop.f32.mrb[0].mxu0
  %v566 = vpop.f32.mrb[0].mxu0
  %v567 = vadd.f32 0.0, %v566
  %v568 = vpop.f32.mrb[0].mxu0
  %569 = vdwg.mxu0
  %v570 = vadd.f32 %v54, %v444
  %v571 = vadd.f32 %v55, %v447
  %v572 = vadd.f32 %v56, %v452
  %v573 = vadd.f32 %v57, %v455
  %v574 = vadd.f32 %v58, %v460
  %v575 = vadd.f32 %v59, %v463
  %v576 = vadd.f32 %v60, %v468
  %v577 = vadd.f32 %v61, %v471
  %v578 = vadd.f32 %v62, %v476
  %v579 = vadd.f32 %v63, %v479
  %v580 = vadd.f32 %v64, %v484
  %v581 = vadd.f32 %v65, %v487
  %v582 = vadd.f32 %v66, %v492
  %v583 = vadd.f32 %v67, %v495
  %v584 = vadd.f32 %v68, %v500
  %v585 = vadd.f32 %v69, %v503
  %v586 = vadd.f32 %v70, %v508
  %v587 = vadd.f32 %v71, %v511
  %v588 = vadd.f32 %v72, %v516
  %v589 = vadd.f32 %v73, %v519
  %v590 = vadd.f32 %v74, %v524
  %v591 = vadd.f32 %v75, %v527
  %v592 = vadd.f32 %v76, %v532
  %v593 = vadd.f32 %v77, %v535
  %v594 = vadd.f32 %v78, %v540
  %v595 = vadd.f32 %v79, %v543
  %v596 = vadd.f32 %v80, %v548
  %v597 = vadd.f32 %v81, %v551
  %v598 = vadd.f32 %v82, %v556
  %v599 = vadd.f32 %v83, %v559
  %v600 = vadd.f32 %v84, %v564
  %v601 = vadd.f32 %v85, %v567
  %602 = vst [vmem:[#allocation2] sm:$0xff] %v570
  %603 = vst [vmem:[#allocation2 + $0x8] sm:$0xff] %v571
  %604 = vst [vmem:[#allocation2 + $0x10] sm:$0xff] %v572
  %605 = vst [vmem:[#allocation2 + $0x18] sm:$0xff] %v573
  %606 = vst [vmem:[#allocation2 + $0x20] sm:$0xff] %v574
  %607 = vst [vmem:[#allocation2 + $0x28] sm:$0xff] %v575
  %608 = vst [vmem:[#allocation2 + $0x30] sm:$0xff] %v576
  %609 = vst [vmem:[#allocation2 + $0x38] sm:$0xff] %v577
  %610 = vst [vmem:[#allocation2 + $0x40] sm:$0xff] %v578
  %611 = vst [vmem:[#allocation2 + $0x48] sm:$0xff] %v579
  %612 = vst [vmem:[#allocation2 + $0x50] sm:$0xff] %v580
  %613 = vst [vmem:[#allocation2 + $0x58] sm:$0xff] %v581
  %614 = vst [vmem:[#allocation2 + $0x60] sm:$0xff] %v582
  %615 = vst [vmem:[#allocation2 + $0x68] sm:$0xff] %v583
  %616 = vst [vmem:[#allocation2 + $0x70] sm:$0xff] %v584
  %617 = vst [vmem:[#allocation2 + $0x78] sm:$0xff] %v585
  %618 = vst [vmem:[#allocation2 + $0x80] sm:$0xff] %v586
  %619 = vst [vmem:[#allocation2 + $0x88] sm:$0xff] %v587
  %620 = vst [vmem:[#allocation2 + $0x90] sm:$0xff] %v588
  %621 = vst [vmem:[#allocation2 + $0x98] sm:$0xff] %v589
  %622 = vst [vmem:[#allocation2 + $0xa0] sm:$0xff] %v590
  %623 = vst [vmem:[#allocation2 + $0xa8] sm:$0xff] %v591
  %624 = vst [vmem:[#allocation2 + $0xb0] sm:$0xff] %v592
  %625 = vst [vmem:[#allocation2 + $0xb8] sm:$0xff] %v593
  %626 = vst [vmem:[#allocation2 + $0xc0] sm:$0xff] %v594
  %627 = vst [vmem:[#allocation2 + $0xc8] sm:$0xff] %v595
  %628 = vst [vmem:[#allocation2 + $0xd0] sm:$0xff] %v596
  %629 = vst [vmem:[#allocation2 + $0xd8] sm:$0xff] %v597
  %630 = vst [vmem:[#allocation2 + $0xe0] sm:$0xff] %v598
  %631 = vst [vmem:[#allocation2 + $0xe8] sm:$0xff] %v599
  %632 = vst [vmem:[#allocation2 + $0xf0] sm:$0xff] %v600
  %633 = vst [vmem:[#allocation2 + $0xf8] sm:$0xff] %v601
  // Predicated region
  $region22: #{hgnn_time_forward.3} parent=0 // pred_check
    %p634 = pneg %p18
  $region23: #{hgnn_time_forward.3} parent=0 // pred_check_branch
    %636 = sbr.rel (%p634) target = $region25
  $region24: #{hgnn_time_forward.3} parent=0 // pred_region
    %v637 = vld [vmem:[#allocation2] sm:$0xff]
    %v638 = vld [vmem:[#allocation2 + $0x8] sm:$0xff]
    %v639 = vld [vmem:[#allocation2 + $0x10] sm:$0xff]
    %v640 = vld [vmem:[#allocation2 + $0x18] sm:$0xff]
    %v641 = vld [vmem:[#allocation2 + $0x20] sm:$0xff]
    %v642 = vld [vmem:[#allocation2 + $0x28] sm:$0xff]
    %v643 = vld [vmem:[#allocation2 + $0x30] sm:$0xff]
    %v644 = vld [vmem:[#allocation2 + $0x38] sm:$0xff]
    %v645 = vld [vmem:[#allocation2 + $0x40] sm:$0xff]
    %v646 = vld [vmem:[#allocation2 + $0x48] sm:$0xff]
    %v647 = vld [vmem:[#allocation2 + $0x50] sm:$0xff]
    %v648 = vld [vmem:[#allocation2 + $0x58] sm:$0xff]
    %v649 = vld [vmem:[#allocation2 + $0x60] sm:$0xff]
    %v650 = vld [vmem:[#allocation2 + $0x68] sm:$0xff]
    %v651 = vld [vmem:[#allocation2 + $0x70] sm:$0xff]
    %v652 = vld [vmem:[#allocation2 + $0x78] sm:$0xff]
    %v653 = vld [vmem:[#allocation2 + $0x80] sm:$0xff]
    %v654 = vld [vmem:[#allocation2 + $0x88] sm:$0xff]
    %v655 = vld [vmem:[#allocation2 + $0x90] sm:$0xff]
    %v656 = vld [vmem:[#allocation2 + $0x98] sm:$0xff]
    %v657 = vld [vmem:[#allocation2 + $0xa0] sm:$0xff]
    %v658 = vld [vmem:[#allocation2 + $0xa8] sm:$0xff]
    %v659 = vld [vmem:[#allocation2 + $0xb0] sm:$0xff]
    %v660 = vld [vmem:[#allocation2 + $0xb8] sm:$0xff]
    %v661 = vld [vmem:[#allocation2 + $0xc0] sm:$0xff]
    %v662 = vld [vmem:[#allocation2 + $0xc8] sm:$0xff]
    %v663 = vld [vmem:[#allocation2 + $0xd0] sm:$0xff]
    %v664 = vld [vmem:[#allocation2 + $0xd8] sm:$0xff]
    %v665 = vld [vmem:[#allocation2 + $0xe0] sm:$0xff]
    %v666 = vld [vmem:[#allocation2 + $0xe8] sm:$0xff]
    %v667 = vld [vmem:[#allocation2 + $0xf0] sm:$0xff]
    %v668 = vld [vmem:[#allocation2 + $0xf8] sm:$0xff]
    %v669 = vmax.f32 %v637, 0.0
    %v670 = vmax.f32 %v638, 0.0
    %v671 = vmax.f32 %v639, 0.0
    %v672 = vmax.f32 %v640, 0.0
    %v673 = vmax.f32 %v641, 0.0
    %v674 = vmax.f32 %v642, 0.0
    %v675 = vmax.f32 %v643, 0.0
    %v676 = vmax.f32 %v644, 0.0
    %v677 = vmax.f32 %v645, 0.0
    %v678 = vmax.f32 %v646, 0.0
    %v679 = vmax.f32 %v647, 0.0
    %v680 = vmax.f32 %v648, 0.0
    %v681 = vmax.f32 %v649, 0.0
    %v682 = vmax.f32 %v650, 0.0
    %v683 = vmax.f32 %v651, 0.0
    %v684 = vmax.f32 %v652, 0.0
    %v685 = vmax.f32 %v653, 0.0
    %v686 = vmax.f32 %v654, 0.0
    %v687 = vmax.f32 %v655, 0.0
    %v688 = vmax.f32 %v656, 0.0
    %v689 = vmax.f32 %v657, 0.0
    %v690 = vmax.f32 %v658, 0.0
    %v691 = vmax.f32 %v659, 0.0
    %v692 = vmax.f32 %v660, 0.0
    %v693 = vmax.f32 %v661, 0.0
    %v694 = vmax.f32 %v662, 0.0
    %v695 = vmax.f32 %v663, 0.0
    %v696 = vmax.f32 %v664, 0.0
    %v697 = vmax.f32 %v665, 0.0
    %v698 = vmax.f32 %v666, 0.0
    %v699 = vmax.f32 %v667, 0.0
    %v700 = vmax.f32 %v668, 0.0
    %v701 = vpack.c.bf16 %v670, %v669
    %v702 = vpack.c.bf16 %v672, %v671
    %v703 = vpack.c.bf16 %v674, %v673
    %v704 = vpack.c.bf16 %v676, %v675
    %v705 = vpack.c.bf16 %v678, %v677
    %v706 = vpack.c.bf16 %v680, %v679
    %v707 = vpack.c.bf16 %v682, %v681
    %v708 = vpack.c.bf16 %v684, %v683
    %v709 = vpack.c.bf16 %v686, %v685
    %v710 = vpack.c.bf16 %v688, %v687
    %v711 = vpack.c.bf16 %v690, %v689
    %v712 = vpack.c.bf16 %v692, %v691
    %v713 = vpack.c.bf16 %v694, %v693
    %v714 = vpack.c.bf16 %v696, %v695
    %v715 = vpack.c.bf16 %v698, %v697
    %v716 = vpack.c.bf16 %v700, %v699
    %v717 = vld [vmem:[%s2] sm:$0xf]
    %v718 = vld [vmem:[%s2 + $0x4] sm:$0xf]
    %v719 = vld [vmem:[%s2 + $0x8] sm:$0xf]
    %v720 = vld [vmem:[%s2 + $0xc] sm:$0xf]
    %v721 = vld [vmem:[%s2 + $0x10] sm:$0xf]
    %v722 = vld [vmem:[%s2 + $0x14] sm:$0xf]
    %v723 = vld [vmem:[%s2 + $0x18] sm:$0xf]
    %v724 = vld [vmem:[%s2 + $0x1c] sm:$0xf]
    %v725 = vld [vmem:[%s2 + $0x20] sm:$0xf]
    %v726 = vld [vmem:[%s2 + $0x24] sm:$0xf]
    %v727 = vld [vmem:[%s2 + $0x28] sm:$0xf]
    %v728 = vld [vmem:[%s2 + $0x2c] sm:$0xf]
    %v729 = vld [vmem:[%s2 + $0x30] sm:$0xf]
    %v730 = vld [vmem:[%s2 + $0x34] sm:$0xf]
    %v731 = vld [vmem:[%s2 + $0x38] sm:$0xf]
    %v732 = vld [vmem:[%s2 + $0x3c] sm:$0xf]
    %v733 = vld [vmem:[%s3] sm:$0x1]
    %v735 = vlaneseq
    %v736 = vshrl.u32 %v735, 7
    %v737 = vsub.s32 0, %v736
    %v738 = vrot.slane %v733, %v737
    %v756 = vunpack.c.l.b16 %v717
    %v757 = vunpack.c.l.b16 %v718
    %v758 = vunpack.c.l.b16 %v719
    %v759 = vunpack.c.l.b16 %v720
    %v760 = vunpack.c.l.b16 %v721
    %v761 = vunpack.c.l.b16 %v722
    %v762 = vunpack.c.l.b16 %v723
    %v763 = vunpack.c.l.b16 %v724
    %v764 = vunpack.c.l.b16 %v725
    %v765 = vunpack.c.l.b16 %v726
    %v766 = vunpack.c.l.b16 %v727
    %v767 = vunpack.c.l.b16 %v728
    %v768 = vunpack.c.l.b16 %v729
    %v769 = vunpack.c.l.b16 %v730
    %v770 = vunpack.c.l.b16 %v731
    %v771 = vunpack.c.l.b16 %v732
    %v772 = vpack.c.b16 %v757, %v756
    %v773 = vpack.c.b16 %v759, %v758
    %v774 = vpack.c.b16 %v761, %v760
    %v775 = vpack.c.b16 %v763, %v762
    %v776 = vpack.c.b16 %v765, %v764
    %v777 = vpack.c.b16 %v767, %v766
    %v778 = vpack.c.b16 %v769, %v768
    %v779 = vpack.c.b16 %v771, %v770
    %788 = vmatprep.subr.bf16.mxu0 0
    %789 = vmatpush1.bf16.msra.mxu0 %v772
    %790 = vmatprep.subr.bf16.mxu0 0
    %791 = vmatpush1.bf16.msra.mxu0 %v773
    %792 = vmatprep.subr.bf16.mxu0 0
    %793 = vmatpush1.bf16.msra.mxu0 %v774
    %794 = vmatprep.subr.bf16.mxu0 0
    %795 = vmatpush1.bf16.msra.mxu0 %v775
    %796 = vmatprep.subr.bf16.mxu0 0
    %797 = vmatpush1.bf16.msra.mxu0 %v776
    %798 = vmatprep.subr.bf16.mxu0 0
    %799 = vmatpush1.bf16.msra.mxu0 %v777
    %800 = vmatprep.subr.bf16.mxu0 0
    %801 = vmatpush1.bf16.msra.mxu0 %v778
    %802 = vmatprep.subr.bf16.mxu0 0
    %803 = vmatpush1.bf16.msra.mxu0 %v779
    %804 = vmatprep.subr.bf16.mxu0 0
    %805 = vmatpush1.bf16.msra.mxu0 0
    %806 = vmatprep.subr.bf16.mxu0 0
    %807 = vmatpush1.bf16.msra.mxu0 0
    %808 = vmatprep.subr.bf16.mxu0 0
    %809 = vmatpush1.bf16.msra.mxu0 0
    %810 = vmatprep.subr.bf16.mxu0 0
    %811 = vmatpush1.bf16.msra.mxu0 0
    %812 = vmatprep.subr.bf16.mxu0 0
    %813 = vmatpush1.bf16.msra.mxu0 0
    %814 = vmatprep.subr.bf16.mxu0 0
    %815 = vmatpush1.bf16.msra.mxu0 0
    %816 = vmatprep.subr.bf16.mxu0 0
    %817 = vmatpush1.bf16.msra.mxu0 0
    %818 = vmatprep.subr.bf16.mxu0 0
    %819 = vmatpush1.bf16.msra.mxu0 0
    %820 = vmatprep.mubr.bf16.mxu0 0
    %821 = vmatmul.mubr.bf16.gmra.mrb[0].mxu0 %v701
    %v822 = vpop.f32.mrb[0].mxu0
    %v823 = vadd.f32 %v738, %v822
    %v824 = vpop.f32.mrb[0].mxu0
    %v825 = vpop.f32.mrb[0].mxu0
    %v826 = vadd.f32 %v738, %v825
    %v827 = vpop.f32.mrb[0].mxu0
    %828 = vmatprep.mubr.bf16.mxu0 0
    %829 = vmatmul.mubr.bf16.gmra.mrb[0].mxu0 %v702
    %v830 = vpop.f32.mrb[0].mxu0
    %v831 = vadd.f32 %v738, %v830
    %v832 = vpop.f32.mrb[0].mxu0
    %v833 = vpop.f32.mrb[0].mxu0
    %v834 = vadd.f32 %v738, %v833
    %v835 = vpop.f32.mrb[0].mxu0
    %836 = vmatprep.mubr.bf16.mxu0 0
    %837 = vmatmul.mubr.bf16.gmra.mrb[0].mxu0 %v703
    %v838 = vpop.f32.mrb[0].mxu0
    %v839 = vadd.f32 %v738, %v838
    %v840 = vpop.f32.mrb[0].mxu0
    %v841 = vpop.f32.mrb[0].mxu0
    %v842 = vadd.f32 %v738, %v841
    %v843 = vpop.f32.mrb[0].mxu0
    %844 = vmatprep.mubr.bf16.mxu0 0
    %845 = vmatmul.mubr.bf16.gmra.mrb[0].mxu0 %v704
    %v846 = vpop.f32.mrb[0].mxu0
    %v847 = vadd.f32 %v738, %v846
    %v848 = vpop.f32.mrb[0].mxu0
    %v849 = vpop.f32.mrb[0].mxu0
    %v850 = vadd.f32 %v738, %v849
    %v851 = vpop.f32.mrb[0].mxu0
    %852 = vmatprep.mubr.bf16.mxu0 0
    %853 = vmatmul.mubr.bf16.gmra.mrb[0].mxu0 %v705
    %v854 = vpop.f32.mrb[0].mxu0
    %v855 = vadd.f32 %v738, %v854
    %v856 = vpop.f32.mrb[0].mxu0
    %v857 = vpop.f32.mrb[0].mxu0
    %v858 = vadd.f32 %v738, %v857
    %v859 = vpop.f32.mrb[0].mxu0
    %860 = vmatprep.mubr.bf16.mxu0 0
    %861 = vmatmul.mubr.bf16.gmra.mrb[0].mxu0 %v706
    %v862 = vpop.f32.mrb[0].mxu0
    %v863 = vadd.f32 %v738, %v862
    %v864 = vpop.f32.mrb[0].mxu0
    %v865 = vpop.f32.mrb[0].mxu0
    %v866 = vadd.f32 %v738, %v865
    %v867 = vpop.f32.mrb[0].mxu0
    %868 = vmatprep.mubr.bf16.mxu0 0
    %869 = vmatmul.mubr.bf16.gmra.mrb[0].mxu0 %v707
    %v870 = vpop.f32.mrb[0].mxu0
    %v871 = vadd.f32 %v738, %v870
    %v872 = vpop.f32.mrb[0].mxu0
    %v873 = vpop.f32.mrb[0].mxu0
    %v874 = vadd.f32 %v738, %v873
    %v875 = vpop.f32.mrb[0].mxu0
    %876 = vmatprep.mubr.bf16.mxu0 0
    %877 = vmatmul.mubr.bf16.gmra.mrb[0].mxu0 %v708
    %v878 = vpop.f32.mrb[0].mxu0
    %v879 = vadd.f32 %v738, %v878
    %v880 = vpop.f32.mrb[0].mxu0
    %v881 = vpop.f32.mrb[0].mxu0
    %v882 = vadd.f32 %v738, %v881
    %v883 = vpop.f32.mrb[0].mxu0
    %884 = vmatprep.mubr.bf16.mxu0 0
    %885 = vmatmul.mubr.bf16.gmra.mrb[0].mxu0 %v709
    %v886 = vpop.f32.mrb[0].mxu0
    %v887 = vadd.f32 %v738, %v886
    %v888 = vpop.f32.mrb[0].mxu0
    %v889 = vpop.f32.mrb[0].mxu0
    %v890 = vadd.f32 %v738, %v889
    %v891 = vpop.f32.mrb[0].mxu0
    %892 = vmatprep.mubr.bf16.mxu0 0
    %893 = vmatmul.mubr.bf16.gmra.mrb[0].mxu0 %v710
    %v894 = vpop.f32.mrb[0].mxu0
    %v895 = vadd.f32 %v738, %v894
    %v896 = vpop.f32.mrb[0].mxu0
    %v897 = vpop.f32.mrb[0].mxu0
    %v898 = vadd.f32 %v738, %v897
    %v899 = vpop.f32.mrb[0].mxu0
    %900 = vmatprep.mubr.bf16.mxu0 0
    %901 = vmatmul.mubr.bf16.gmra.mrb[0].mxu0 %v711
    %v902 = vpop.f32.mrb[0].mxu0
    %v903 = vadd.f32 %v738, %v902
    %v904 = vpop.f32.mrb[0].mxu0
    %v905 = vpop.f32.mrb[0].mxu0
    %v906 = vadd.f32 %v738, %v905
    %v907 = vpop.f32.mrb[0].mxu0
    %908 = vmatprep.mubr.bf16.mxu0 0
    %909 = vmatmul.mubr.bf16.gmra.mrb[0].mxu0 %v712
    %v910 = vpop.f32.mrb[0].mxu0
    %v911 = vadd.f32 %v738, %v910
    %v912 = vpop.f32.mrb[0].mxu0
    %v913 = vpop.f32.mrb[0].mxu0
    %v914 = vadd.f32 %v738, %v913
    %v915 = vpop.f32.mrb[0].mxu0
    %916 = vmatprep.mubr.bf16.mxu0 0
    %917 = vmatmul.mubr.bf16.gmra.mrb[0].mxu0 %v713
    %v918 = vpop.f32.mrb[0].mxu0
    %v919 = vadd.f32 %v738, %v918
    %v920 = vpop.f32.mrb[0].mxu0
    %v921 = vpop.f32.mrb[0].mxu0
    %v922 = vadd.f32 %v738, %v921
    %v923 = vpop.f32.mrb[0].mxu0
    %924 = vmatprep.mubr.bf16.mxu0 0
    %925 = vmatmul.mubr.bf16.gmra.mrb[0].mxu0 %v714
    %v926 = vpop.f32.mrb[0].mxu0
    %v927 = vadd.f32 %v738, %v926
    %v928 = vpop.f32.mrb[0].mxu0
    %v929 = vpop.f32.mrb[0].mxu0
    %v930 = vadd.f32 %v738, %v929
    %v931 = vpop.f32.mrb[0].mxu0
    %932 = vmatprep.mubr.bf16.mxu0 0
    %933 = vmatmul.mubr.bf16.gmra.mrb[0].mxu0 %v715
    %v934 = vpop.f32.mrb[0].mxu0
    %v935 = vadd.f32 %v738, %v934
    %v936 = vpop.f32.mrb[0].mxu0
    %v937 = vpop.f32.mrb[0].mxu0
    %v938 = vadd.f32 %v738, %v937
    %v939 = vpop.f32.mrb[0].mxu0
    %940 = vmatprep.mubr.bf16.mxu0 0
    %941 = vmatmul.mubr.bf16.gmra.mrb[0].mxu0 %v716
    %v942 = vpop.f32.mrb[0].mxu0
    %v943 = vadd.f32 %v738, %v942
    %v944 = vpop.f32.mrb[0].mxu0
    %v945 = vpop.f32.mrb[0].mxu0
    %v946 = vadd.f32 %v738, %v945
    %v947 = vpop.f32.mrb[0].mxu0
    %948 = vdwg.mxu0
    %949 = vst [vmem:[%s4] sm:$0xff] %v823
    %950 = vst [vmem:[%s4 + $0x8] sm:$0xff] %v826
    %951 = vst [vmem:[%s4 + $0x10] sm:$0xff] %v831
    %952 = vst [vmem:[%s4 + $0x18] sm:$0xff] %v834
    %953 = vst [vmem:[%s4 + $0x20] sm:$0xff] %v839
    %954 = vst [vmem:[%s4 + $0x28] sm:$0xff] %v842
    %955 = vst [vmem:[%s4 + $0x30] sm:$0xff] %v847
    %956 = vst [vmem:[%s4 + $0x38] sm:$0xff] %v850
    %957 = vst [vmem:[%s4 + $0x40] sm:$0xff] %v855
    %958 = vst [vmem:[%s4 + $0x48] sm:$0xff] %v858
    %959 = vst [vmem:[%s4 + $0x50] sm:$0xff] %v863
    %960 = vst [vmem:[%s4 + $0x58] sm:$0xff] %v866
    %961 = vst [vmem:[%s4 + $0x60] sm:$0xff] %v871
    %962 = vst [vmem:[%s4 + $0x68] sm:$0xff] %v874
    %963 = vst [vmem:[%s4 + $0x70] sm:$0xff] %v879
    %964 = vst [vmem:[%s4 + $0x78] sm:$0xff] %v882
    %965 = vst [vmem:[%s4 + $0x80] sm:$0xff] %v887
    %966 = vst [vmem:[%s4 + $0x88] sm:$0xff] %v890
    %967 = vst [vmem:[%s4 + $0x90] sm:$0xff] %v895
    %968 = vst [vmem:[%s4 + $0x98] sm:$0xff] %v898
    %969 = vst [vmem:[%s4 + $0xa0] sm:$0xff] %v903
    %970 = vst [vmem:[%s4 + $0xa8] sm:$0xff] %v906
    %971 = vst [vmem:[%s4 + $0xb0] sm:$0xff] %v911
    %972 = vst [vmem:[%s4 + $0xb8] sm:$0xff] %v914
    %973 = vst [vmem:[%s4 + $0xc0] sm:$0xff] %v919
    %974 = vst [vmem:[%s4 + $0xc8] sm:$0xff] %v922
    %975 = vst [vmem:[%s4 + $0xd0] sm:$0xff] %v927
    %976 = vst [vmem:[%s4 + $0xd8] sm:$0xff] %v930
    %977 = vst [vmem:[%s4 + $0xe0] sm:$0xff] %v935
    %978 = vst [vmem:[%s4 + $0xe8] sm:$0xff] %v938
    %979 = vst [vmem:[%s4 + $0xf0] sm:$0xff] %v943
    %980 = vst [vmem:[%s4 + $0xf8] sm:$0xff] %v946
  $region25: #{hgnn_time_forward.3} parent=0 // pred_fallthru
    _
  // Predicated region
  $region26: #{hgnn_time_forward.3} parent=0 // pred_check
    _
  $region27: #{hgnn_time_forward.3} parent=0 // pred_check_branch
    %982 = sbr.rel (0) target = $region29
  $region28: #{hgnn_time_forward.3} parent=0 // pred_region
    _
  $region29: #{hgnn_time_forward.3} parent=0 // pred_fallthru
    _
  // Predicated region
  $region30: #{hgnn_time_forward.3} parent=0 // pred_check
    _
  $region31: #{hgnn_time_forward.3} parent=0 // pred_check_branch
    %984 = sbr.rel (0) target = $region33
  $region32: #{hgnn_time_forward.3} parent=0 // pred_region
    _
  $region33: #{hgnn_time_forward.3} parent=0 // pred_fallthru
    _

</llo_original>
